<compile_context>
chip_gen: v7x
topology: tpu7x:2x2x1
jax: 0.10.0
libtpu: 0.0.40
codegen_flags: <defaults>
</compile_context>

<pallas_src>
import functools

import numpy as np
import jax
import jax.numpy as jnp
from jax import lax
from jax.experimental import pallas as pl
from jax.experimental.pallas import tpu as pltpu


_VMEM = pl.BlockSpec(memory_space=pltpu.MemorySpace.VMEM)
_KERNEL_SIZE = 4
_STRIDE = 2
_PADDING = 1
_BN_EPS = 1e-5


# ----------------------------------------------------------------------------
# Fused kernel: whole Generator forward in one pallas_call
# ----------------------------------------------------------------------------
def _generator_kernel(x_ref, w0_ref, b0_ref, *refs, num_layers, inv_counts):
    """Activations live as (N, C*H*W) slabs: rows = batch, lanes = (c, h, w)."""
    # ---- parse positional refs -------------------------------------------
    bn = []
    idx = 0
    for _ in range(num_layers - 1):
        bn.append((refs[idx], refs[idx + 1], refs[idx + 2], refs[idx + 3]))
        idx += 4
    o_ref = refs[idx]

    # ---- Linear(100 -> HW0) + channel-repeat + ConvTranspose2d layer 0 ----
    # All three are folded host-side into a single (100, C1*H1*W1) matrix.
    a = jnp.dot(x_ref[...], w0_ref[...],
                preferred_element_type=jnp.float32) + b0_ref[...]

    for layer in range(num_layers - 1):
        p_ref, pt_ref, gb_ref, m_ref = bn[layer]
        # Fused BatchNorm2d (training-mode batch stats, biased var) + ReLU.
        # Per-channel stats via tiny pooling matmuls; no relayouts.
        # TODO(synk): eval-mode running-stats path of BatchNorm2d not implemented.
        inv_cnt = inv_counts[layer]
        s1 = jnp.dot(a, p_ref[...], preferred_element_type=jnp.float32)      # (N, C)
        s2 = jnp.dot(a * a, p_ref[...], preferred_element_type=jnp.float32)  # (N, C)
        mean = jnp.sum(s1, axis=0, keepdims=True) * inv_cnt                  # (1, C)
        ex2 = jnp.sum(s2, axis=0, keepdims=True) * inv_cnt
        var = ex2 - mean * mean
        inv_std = lax.rsqrt(var + _BN_EPS)
        gb = gb_ref[...]                                                      # (2, C)
        gamma = gb[0:1, :]
        beta = gb[1:2, :]
        scale = gamma * inv_std                                               # (1, C)
        shift = beta - mean * scale
        scale_b = jnp.dot(scale, pt_ref[...], preferred_element_type=jnp.float32)
        shift_b = jnp.dot(shift, pt_ref[...], preferred_element_type=jnp.float32)
        a = jnp.maximum(a * scale_b + shift_b, 0.0)
        # Next ConvTranspose2d: one dense MXU matmul.
        a = jnp.dot(a, m_ref[...], preferred_element_type=jnp.float32)

    # Tanh epilogue on the EUP; numerically-safe equivalent of the reference's
    # (e^x - e^-x) / (e^x + e^-x).
    o_ref[...] = jnp.tanh(a)


# ----------------------------------------------------------------------------
# Host-side constant construction (done once in __init__)
# ----------------------------------------------------------------------------
def _conv_transpose_matrix(weight, h, w, k, stride, padding):
    """Dense (Ci*H*W, Co*OH*OW) matrix M with  out_flat = in_flat @ M  equal to
    ConvTranspose2d(k, stride, padding, bias=False).  Both sides are flattened
    channel-major, spatial (h, w) minor, so NCHW reshapes are metadata-only."""
    wnp = np.asarray(weight, np.float32)
    ci_n, co_n = wnp.shape[0], wnp.shape[1]
    oh = (h - 1) * stride - 2 * padding + k
    ow = (w - 1) * stride - 2 * padding + k
    m = np.zeros((ci_n * h * w, co_n * oh * ow), np.float32)
    ci_idx = np.arange(ci_n)[:, None]
    co_idx = np.arange(co_n)[None, :]
    for ih in range(h):
        for iw in range(w):
            q = ih * w + iw
            for kh in range(k):
                o_h = ih * stride - padding + kh
                if not (0 <= o_h < oh):
                    continue
                for kw in range(k):
                    o_w = iw * stride - padding + kw
                    if not (0 <= o_w < ow):
                        continue
                    p = o_h * ow + o_w
                    m[ci_idx * (h * w) + q, co_idx * (oh * ow) + p] += wnp[:, :, kh, kw]
    return m, oh, ow


class GeneratorPallas:
    def __init__(self, key, latent_dim_size=100, img_size=16, img_channels=3,
                 hidden_channels=(8, 16, 32)):
        n_layers = len(hidden_channels)
        assert img_size % (2 ** n_layers) == 0, "activation size must double at each layer"
        self.n_layers = n_layers
        self.first_image_radius = (img_size // 2 ** n_layers) ** 2
        self.first_channels = hidden_channels[-1]
        # NOTE: reference hard-codes Linear(100, ...) and final channels = 3.
        self.channels = list(reversed(hidden_channels)) + [3]
        self.h0, self.w0 = self.first_image_radius, 1   # rearrange quirk: w == 1

        keys = jax.random.split(key, 2 + n_layers)
        lin_bound = 1.0 / (100.0 ** 0.5)
        self.lin_w = jax.random.uniform(keys[0], (self.first_image_radius, 100),
                                        jnp.float32, -lin_bound, lin_bound)
        self.lin_b = jax.random.uniform(keys[1], (self.first_image_radius,),
                                        jnp.float32, -lin_bound, lin_bound)
        self.conv_ws, self.bn_gammas, self.bn_betas = [], [], []
        for i in range(n_layers):
            ci, co = self.channels[i], self.channels[i + 1]
            sf = 1.0 / (co * _KERNEL_SIZE * _KERNEL_SIZE) ** 0.5
            wconv = sf * (2.0 * jax.random.uniform(
                keys[2 + i], (ci, co, _KERNEL_SIZE, _KERNEL_SIZE), jnp.float32) - 1.0)
            self.conv_ws.append(wconv)
            if i != n_layers - 1:
                self.bn_gammas.append(jnp.ones((co,), jnp.float32))
                self.bn_betas.append(jnp.zeros((co,), jnp.float32))
        self._build_plan()

    def _build_plan(self):
        h, w = self.h0, self.w0
        m_mats, spatial = [], []
        for layer in range(self.n_layers):
            m, oh, ow = _conv_transpose_matrix(self.conv_ws[layer], h, w,
                                               _KERNEL_SIZE, _STRIDE, _PADDING)
            m_mats.append(m)
            spatial.append((oh, ow))
            h, w = oh, ow
        self.out_h, self.out_w = h, w

        # Fold Linear + channel-repeat into the first conv matrix:
        # repeat matrix R[q, c*HW0 + q'] = d(q, q')  =>  R @ M0 = sum over c of M0 blocks.
        c0, hw0 = self.channels[0], self.h0 * self.w0
        rm0 = m_mats[0].reshape(c0, hw0, -1).sum(axis=0)              # (HW0, C1*H1*W1)
        w_fold = np.asarray(self.lin_w).T @ rm0                       # (100, C1*H1*W1)
        b_fold = np.asarray(self.lin_b).reshape(1, hw0) @ rm0         # (1,  C1*H1*W1)

        self.w_fold = jnp.asarray(w_fold)
        self.b_fold = jnp.asarray(b_fold)
        self.m_rest = [jnp.asarray(m) for m in m_mats[1:]]

        self.bn_pool, self.bn_bcast, self.bn_gb, self.bn_hw = [], [], [], []
        for layer in range(self.n_layers - 1):
            co = self.channels[layer + 1]
            oh, ow = spatial[layer]
            # per-channel 0/1 pooling (Co*HW, Co) and broadcast (Co, Co*HW) matrices
            pool = np.kron(np.eye(co, dtype=np.float32),
                           np.ones((oh * ow, 1), np.float32))
            self.bn_pool.append(jnp.asarray(pool))
            self.bn_bcast.append(jnp.asarray(pool.T.copy()))
            self.bn_gb.append(jnp.stack([self.bn_gammas[layer], self.bn_betas[layer]]))
            self.bn_hw.append(oh * ow)

    def __call__(self, x):
        # x: (batch, 100)
        n = x.shape[0]
        operands = [x.astype(jnp.float32), self.w_fold, self.b_fold]
        for layer in range(self.n_layers - 1):
            operands += [self.bn_pool[layer], self.bn_bcast[layer],
                         self.bn_gb[layer], self.m_rest[layer]]
        inv_counts = tuple(1.0 / float(n * hw) for hw in self.bn_hw)
        out_c = self.channels[-1]
        out_d = out_c * self.out_h * self.out_w
        out_slab = pl.pallas_call(
            functools.partial(_generator_kernel,
                              num_layers=self.n_layers,
                              inv_counts=inv_counts),
            in_specs=[_VMEM] * len(operands),
            out_specs=_VMEM,
            out_shape=jax.ShapeDtypeStruct((n, out_d), jnp.float32),
        )(*operands)
        # lanes are (channel, h, w)-major -> pure (metadata-only) reshape to NCHW.
        return out_slab.reshape(n, out_c, self.out_h, self.out_w)


if __name__ == "__main__":
    key = jax.random.PRNGKey(0)
    k_params, k_x = jax.random.split(key)

    # Shapes consistent with the module: batch=2, latent=100 (hard-coded),
    # img_size=16, hidden_channels=[8, 16, 32].
    gen = GeneratorPallas(k_params, img_size=16, hidden_channels=(8, 16, 32))
    x = jax.random.normal(k_x, (2, 100), jnp.float32)

    out = jax.block_until_ready(gen(x))

    # Reference semantics (including the rearrange quirk) give (B, 3, 32, 8).
    assert out.shape == (2, 3, 32, 8), out.shape
    assert out.dtype == jnp.float32
    assert bool(jnp.all(jnp.isfinite(out)))
    assert bool(jnp.all(jnp.abs(out) <= 1.0 + 1e-5))  # tanh output range

    print("KERNEL_OK")
</pallas_src>

<mosaic_0001>
module attributes {stable_mosaic.version = 11 : i64} {
  func.func @_generator_kernel(%arg0: memref<2x100xf32, #tpu.memory_space<vmem>>, %arg1: memref<100x256xf32, #tpu.memory_space<vmem>>, %arg2: memref<1x256xf32, #tpu.memory_space<vmem>>, %arg3: memref<256x16xf32, #tpu.memory_space<vmem>>, %arg4: memref<16x256xf32, #tpu.memory_space<vmem>>, %arg5: memref<2x16xf32, #tpu.memory_space<vmem>>, %arg6: memref<256x512xf32, #tpu.memory_space<vmem>>, %arg7: memref<512x8xf32, #tpu.memory_space<vmem>>, %arg8: memref<8x512xf32, #tpu.memory_space<vmem>>, %arg9: memref<2x8xf32, #tpu.memory_space<vmem>>, %arg10: memref<512x768xf32, #tpu.memory_space<vmem>>, %arg11: memref<2x768xf32, #tpu.memory_space<vmem>>) attributes {dimension_semantics = [], scalar_prefetch = 0 : i64, scratch_operands = 0 : i64, tpu.core_type = #tpu.core_type<tc>} {
    %c0 = arith.constant 0 : index
    %c0_0 = arith.constant 0 : index
    %0 = vector.load %arg0[%c0, %c0_0] : memref<2x100xf32, #tpu.memory_space<vmem>>, vector<2x100xf32>
    %c0_1 = arith.constant 0 : index
    %c0_2 = arith.constant 0 : index
    %1 = vector.load %arg1[%c0_1, %c0_2] : memref<100x256xf32, #tpu.memory_space<vmem>>, vector<100x256xf32>
    %cst = arith.constant dense<0.000000e+00> : vector<2x256xf32>
    %2 = tpu.matmul %0, %1, %cst {dimension_numbers = #tpu.dot_dimension_numbers<[1], [0], [0], [1], [0, 0, 1, 1], [], []>} : vector<2x100xf32>, vector<100x256xf32>, vector<2x256xf32> -> vector<2x256xf32>
    %c0_3 = arith.constant 0 : index
    %c0_4 = arith.constant 0 : index
    %3 = vector.load %arg2[%c0_3, %c0_4] : memref<1x256xf32, #tpu.memory_space<vmem>>, vector<1x256xf32>
    %4 = vector.broadcast %3 : vector<1x256xf32> to vector<2x256xf32>
    %5 = arith.addf %2, %4 : vector<2x256xf32>
    %c0_5 = arith.constant 0 : index
    %c0_6 = arith.constant 0 : index
    %6 = vector.load %arg3[%c0_5, %c0_6] : memref<256x16xf32, #tpu.memory_space<vmem>>, vector<256x16xf32>
    %cst_7 = arith.constant dense<0.000000e+00> : vector<2x16xf32>
    %7 = tpu.matmul %5, %6, %cst_7 {dimension_numbers = #tpu.dot_dimension_numbers<[1], [0], [0], [1], [0, 0, 1, 1], [], []>} : vector<2x256xf32>, vector<256x16xf32>, vector<2x16xf32> -> vector<2x16xf32>
    %8 = arith.mulf %5, %5 : vector<2x256xf32>
    %c0_8 = arith.constant 0 : index
    %c0_9 = arith.constant 0 : index
    %9 = vector.load %arg3[%c0_8, %c0_9] : memref<256x16xf32, #tpu.memory_space<vmem>>, vector<256x16xf32>
    %cst_10 = arith.constant dense<0.000000e+00> : vector<2x16xf32>
    %10 = tpu.matmul %8, %9, %cst_10 {dimension_numbers = #tpu.dot_dimension_numbers<[1], [0], [0], [1], [0, 0, 1, 1], [], []>} : vector<2x256xf32>, vector<256x16xf32>, vector<2x16xf32> -> vector<2x16xf32>
    %cst_11 = arith.constant dense<0.000000e+00> : vector<16xf32>
    %11 = vector.multi_reduction <add>, %7, %cst_11 [0] : vector<2x16xf32> to vector<16xf32>
    %12 = vector.shape_cast %11 : vector<16xf32> to vector<1x16xf32>
    %cst_12 = arith.constant 3.125000e-02 : f32
    %13 = vector.broadcast %cst_12 : f32 to vector<1x16xf32>
    %14 = arith.mulf %12, %13 : vector<1x16xf32>
    %cst_13 = arith.constant dense<0.000000e+00> : vector<16xf32>
    %15 = vector.multi_reduction <add>, %10, %cst_13 [0] : vector<2x16xf32> to vector<16xf32>
    %16 = vector.shape_cast %15 : vector<16xf32> to vector<1x16xf32>
    %cst_14 = arith.constant 3.125000e-02 : f32
    %17 = vector.broadcast %cst_14 : f32 to vector<1x16xf32>
    %18 = arith.mulf %16, %17 : vector<1x16xf32>
    %19 = arith.mulf %14, %14 : vector<1x16xf32>
    %20 = arith.subf %18, %19 : vector<1x16xf32>
    %cst_15 = arith.constant 9.99999974E-6 : f32
    %21 = vector.broadcast %cst_15 : f32 to vector<1x16xf32>
    %22 = arith.addf %20, %21 : vector<1x16xf32>
    %23 = math.rsqrt %22 : vector<1x16xf32>
    %c0_16 = arith.constant 0 : index
    %c0_17 = arith.constant 0 : index
    %24 = vector.load %arg5[%c0_16, %c0_17] : memref<2x16xf32, #tpu.memory_space<vmem>>, vector<2x16xf32>
    %25 = vector.extract_strided_slice %24 {offsets = [0, 0], sizes = [1, 16], strides = [1, 1]} : vector<2x16xf32> to vector<1x16xf32>
    %26 = vector.extract_strided_slice %24 {offsets = [1, 0], sizes = [1, 16], strides = [1, 1]} : vector<2x16xf32> to vector<1x16xf32>
    %27 = arith.mulf %25, %23 : vector<1x16xf32>
    %28 = arith.mulf %14, %27 : vector<1x16xf32>
    %29 = arith.subf %26, %28 : vector<1x16xf32>
    %c0_18 = arith.constant 0 : index
    %c0_19 = arith.constant 0 : index
    %30 = vector.load %arg4[%c0_18, %c0_19] : memref<16x256xf32, #tpu.memory_space<vmem>>, vector<16x256xf32>
    %cst_20 = arith.constant dense<0.000000e+00> : vector<1x256xf32>
    %31 = tpu.matmul %27, %30, %cst_20 {dimension_numbers = #tpu.dot_dimension_numbers<[1], [0], [0], [1], [0, 0, 1, 1], [], []>} : vector<1x16xf32>, vector<16x256xf32>, vector<1x256xf32> -> vector<1x256xf32>
    %c0_21 = arith.constant 0 : index
    %c0_22 = arith.constant 0 : index
    %32 = vector.load %arg4[%c0_21, %c0_22] : memref<16x256xf32, #tpu.memory_space<vmem>>, vector<16x256xf32>
    %cst_23 = arith.constant dense<0.000000e+00> : vector<1x256xf32>
    %33 = tpu.matmul %29, %32, %cst_23 {dimension_numbers = #tpu.dot_dimension_numbers<[1], [0], [0], [1], [0, 0, 1, 1], [], []>} : vector<1x16xf32>, vector<16x256xf32>, vector<1x256xf32> -> vector<1x256xf32>
    %34 = vector.broadcast %31 : vector<1x256xf32> to vector<2x256xf32>
    %35 = arith.mulf %5, %34 : vector<2x256xf32>
    %36 = vector.broadcast %33 : vector<1x256xf32> to vector<2x256xf32>
    %37 = arith.addf %35, %36 : vector<2x256xf32>
    %cst_24 = arith.constant 0.000000e+00 : f32
    %38 = vector.broadcast %cst_24 : f32 to vector<2x256xf32>
    %39 = arith.maximumf %37, %38 : vector<2x256xf32>
    %c0_25 = arith.constant 0 : index
    %c0_26 = arith.constant 0 : index
    %40 = vector.load %arg6[%c0_25, %c0_26] : memref<256x512xf32, #tpu.memory_space<vmem>>, vector<256x512xf32>
    %cst_27 = arith.constant dense<0.000000e+00> : vector<2x512xf32>
    %41 = tpu.matmul %39, %40, %cst_27 {dimension_numbers = #tpu.dot_dimension_numbers<[1], [0], [0], [1], [0, 0, 1, 1], [], []>} : vector<2x256xf32>, vector<256x512xf32>, vector<2x512xf32> -> vector<2x512xf32>
    %c0_28 = arith.constant 0 : index
    %c0_29 = arith.constant 0 : index
    %42 = vector.load %arg7[%c0_28, %c0_29] : memref<512x8xf32, #tpu.memory_space<vmem>>, vector<512x8xf32>
    %cst_30 = arith.constant dense<0.000000e+00> : vector<2x8xf32>
    %43 = tpu.matmul %41, %42, %cst_30 {dimension_numbers = #tpu.dot_dimension_numbers<[1], [0], [0], [1], [0, 0, 1, 1], [], []>} : vector<2x512xf32>, vector<512x8xf32>, vector<2x8xf32> -> vector<2x8xf32>
    %44 = arith.mulf %41, %41 : vector<2x512xf32>
    %c0_31 = arith.constant 0 : index
    %c0_32 = arith.constant 0 : index
    %45 = vector.load %arg7[%c0_31, %c0_32] : memref<512x8xf32, #tpu.memory_space<vmem>>, vector<512x8xf32>
    %cst_33 = arith.constant dense<0.000000e+00> : vector<2x8xf32>
    %46 = tpu.matmul %44, %45, %cst_33 {dimension_numbers = #tpu.dot_dimension_numbers<[1], [0], [0], [1], [0, 0, 1, 1], [], []>} : vector<2x512xf32>, vector<512x8xf32>, vector<2x8xf32> -> vector<2x8xf32>
    %cst_34 = arith.constant dense<0.000000e+00> : vector<8xf32>
    %47 = vector.multi_reduction <add>, %43, %cst_34 [0] : vector<2x8xf32> to vector<8xf32>
    %48 = vector.shape_cast %47 : vector<8xf32> to vector<1x8xf32>
    %cst_35 = arith.constant 7.812500e-03 : f32
    %49 = vector.broadcast %cst_35 : f32 to vector<1x8xf32>
    %50 = arith.mulf %48, %49 : vector<1x8xf32>
    %cst_36 = arith.constant dense<0.000000e+00> : vector<8xf32>
    %51 = vector.multi_reduction <add>, %46, %cst_36 [0] : vector<2x8xf32> to vector<8xf32>
    %52 = vector.shape_cast %51 : vector<8xf32> to vector<1x8xf32>
    %cst_37 = arith.constant 7.812500e-03 : f32
    %53 = vector.broadcast %cst_37 : f32 to vector<1x8xf32>
    %54 = arith.mulf %52, %53 : vector<1x8xf32>
    %55 = arith.mulf %50, %50 : vector<1x8xf32>
    %56 = arith.subf %54, %55 : vector<1x8xf32>
    %cst_38 = arith.constant 9.99999974E-6 : f32
    %57 = vector.broadcast %cst_38 : f32 to vector<1x8xf32>
    %58 = arith.addf %56, %57 : vector<1x8xf32>
    %59 = math.rsqrt %58 : vector<1x8xf32>
    %c0_39 = arith.constant 0 : index
    %c0_40 = arith.constant 0 : index
    %60 = vector.load %arg9[%c0_39, %c0_40] : memref<2x8xf32, #tpu.memory_space<vmem>>, vector<2x8xf32>
    %61 = vector.extract_strided_slice %60 {offsets = [0, 0], sizes = [1, 8], strides = [1, 1]} : vector<2x8xf32> to vector<1x8xf32>
    %62 = vector.extract_strided_slice %60 {offsets = [1, 0], sizes = [1, 8], strides = [1, 1]} : vector<2x8xf32> to vector<1x8xf32>
    %63 = arith.mulf %61, %59 : vector<1x8xf32>
    %64 = arith.mulf %50, %63 : vector<1x8xf32>
    %65 = arith.subf %62, %64 : vector<1x8xf32>
    %c0_41 = arith.constant 0 : index
    %c0_42 = arith.constant 0 : index
    %66 = vector.load %arg8[%c0_41, %c0_42] : memref<8x512xf32, #tpu.memory_space<vmem>>, vector<8x512xf32>
    %cst_43 = arith.constant dense<0.000000e+00> : vector<1x512xf32>
    %67 = tpu.matmul %63, %66, %cst_43 {dimension_numbers = #tpu.dot_dimension_numbers<[1], [0], [0], [1], [0, 0, 1, 1], [], []>} : vector<1x8xf32>, vector<8x512xf32>, vector<1x512xf32> -> vector<1x512xf32>
    %c0_44 = arith.constant 0 : index
    %c0_45 = arith.constant 0 : index
    %68 = vector.load %arg8[%c0_44, %c0_45] : memref<8x512xf32, #tpu.memory_space<vmem>>, vector<8x512xf32>
    %cst_46 = arith.constant dense<0.000000e+00> : vector<1x512xf32>
    %69 = tpu.matmul %65, %68, %cst_46 {dimension_numbers = #tpu.dot_dimension_numbers<[1], [0], [0], [1], [0, 0, 1, 1], [], []>} : vector<1x8xf32>, vector<8x512xf32>, vector<1x512xf32> -> vector<1x512xf32>
    %70 = vector.broadcast %67 : vector<1x512xf32> to vector<2x512xf32>
    %71 = arith.mulf %41, %70 : vector<2x512xf32>
    %72 = vector.broadcast %69 : vector<1x512xf32> to vector<2x512xf32>
    %73 = arith.addf %71, %72 : vector<2x512xf32>
    %cst_47 = arith.constant 0.000000e+00 : f32
    %74 = vector.broadcast %cst_47 : f32 to vector<2x512xf32>
    %75 = arith.maximumf %73, %74 : vector<2x512xf32>
    %c0_48 = arith.constant 0 : index
    %c0_49 = arith.constant 0 : index
    %76 = vector.load %arg10[%c0_48, %c0_49] : memref<512x768xf32, #tpu.memory_space<vmem>>, vector<512x768xf32>
    %cst_50 = arith.constant dense<0.000000e+00> : vector<2x768xf32>
    %77 = tpu.matmul %75, %76, %cst_50 {dimension_numbers = #tpu.dot_dimension_numbers<[1], [0], [0], [1], [0, 0, 1, 1], [], []>} : vector<2x512xf32>, vector<512x768xf32>, vector<2x768xf32> -> vector<2x768xf32>
    %78 = math.tanh %77 : vector<2x768xf32>
    %c0_51 = arith.constant 0 : index
    %c0_52 = arith.constant 0 : index
    %79 = vector.load %arg11[%c0_51, %c0_52] : memref<2x768xf32, #tpu.memory_space<vmem>>, vector<2x768xf32>
    tpu.vector_store %arg11[%c0_51, %c0_52], %78 {strides = array<i32>} : memref<2x768xf32, #tpu.memory_space<vmem>>, vector<2x768xf32>,
    return
  }
}

</mosaic_0001>

<llo_original>
// kernel: tpu_custom_call.1
$region0: #{tpu_custom_call.1}
  #allocation0 [shape = 'u32[]', space=smem, size = 0x4, offset = 0x4, fixed_abs, tag = 'smem constant byte address 0x4 - core index']
  #allocation1 [shape = 'u32[144,128]{1,0:T(1,128)}', space=vmem, size = 0x12000, scoped, tag = 'internal scratch']
  %s0 = inlined_call_operand.hbm [shape: f32[2,100], index: 0, kind: input, shape index: {}]
  %s1 = inlined_call_operand.hbm [shape: f32[100,256], index: 1, kind: input, shape index: {}]
  %s2 = inlined_call_operand.hbm [shape: f32[1,256], index: 2, kind: input, shape index: {}]
  %s3 = inlined_call_operand.vmem [shape: f32[256,16], index: 3, kind: input, shape index: {}]
  %s4 = inlined_call_operand.hbm [shape: f32[16,256], index: 4, kind: input, shape index: {}]
  %s5 = inlined_call_operand.hbm [shape: f32[2,16], index: 5, kind: input, shape index: {}]
  %s6 = inlined_call_operand.hbm [shape: f32[256,512], index: 6, kind: input, shape index: {}]
  %s7 = inlined_call_operand.vmem [shape: f32[512,8], index: 7, kind: input, shape index: {}]
  %s8 = inlined_call_operand.hbm [shape: f32[8,512], index: 8, kind: input, shape index: {}]
  %s9 = inlined_call_operand.hbm [shape: f32[2,8], index: 9, kind: input, shape index: {}]
  %s10 = inlined_call_operand.hbm [shape: f32[512,768], index: 10, kind: input, shape index: {}]
  %s11 = inlined_call_operand.hbm [shape: f32[2,768], index: 11, kind: output, shape index: {}]
  %s12 = sld [smem:[#allocation0]]
  $region90: #{tpu_custom_call.1} parent=0
    _
  %s14 = ssub.s32 1, %s12
  %s15 = scalar_select 0, %s14, %s12
  $region1: #{tpu_custom_call.1} parent=0
    #allocation2 [shape = 'u8[1024]{0}', space=vmem, size = 0x400, scoped, tag = 'input window, operand 0, single buffered']
    #allocation3 [shape = 's32[1]{0}', space=sflag, size = 0x4, scoped, tag = 'scoped memory for tpu_custom_call.1']
    #allocation4 [shape = 's32[1]{0}', space=sflag, size = 0x4, scoped, tag = 'scoped memory for tpu_custom_call.1']
    #allocation5 [shape = 'u8[106496]{0}', space=vmem, size = 0x1a000, scoped, tag = 'input window, operand 1, single buffered']
    #allocation6 [shape = 's32[1]{0}', space=sflag, size = 0x4, scoped, tag = 'scoped memory for tpu_custom_call.1']
    #allocation7 [shape = 'u8[1024]{0}', space=vmem, size = 0x400, scoped, tag = 'input window, operand 2, single buffered']
    #allocation8 [shape = 'u8[16384]{0}', space=vmem, size = 0x4000, scoped, tag = 'input window, operand 4, single buffered']
    #allocation9 [shape = 's32[1]{0}', space=sflag, size = 0x4, scoped, tag = 'scoped memory for tpu_custom_call.1']
    #allocation10 [shape = 'u8[1024]{0}', space=vmem, size = 0x400, scoped, tag = 'input window, operand 5, single buffered']
    #allocation11 [shape = 'u8[524288]{0}', space=vmem, size = 0x80000, scoped, tag = 'input window, operand 6, single buffered']
    #allocation12 [shape = 's32[1]{0}', space=sflag, size = 0x4, scoped, tag = 'scoped memory for tpu_custom_call.1']
    #allocation13 [shape = 'u8[16384]{0}', space=vmem, size = 0x4000, scoped, tag = 'input window, operand 8, single buffered']
    #allocation14 [shape = 'u8[1024]{0}', space=vmem, size = 0x400, scoped, tag = 'input window, operand 9, single buffered']
    #allocation15 [shape = 's32[1]{0}', space=sflag, size = 0x4, scoped, tag = 'scoped memory for tpu_custom_call.1']
    #allocation16 [shape = 'u8[1572864]{0}', space=vmem, size = 0x180000, scoped, tag = 'input window, operand 10, single buffered']
    #allocation17 [shape = 'u8[6144]{0}', space=vmem, size = 0x1800, scoped, tag = 'output window, operand 0, single buffered']
    %16 = vsyncpa [#allocation3], 0
    %17 = vsyncpa [#allocation6], 0
    %18 = vsyncpa [#allocation9], 0
    %19 = vsyncpa [#allocation12], 0
    %20 = vsyncpa [#allocation15], 0
    %21 = vsyncpa [#allocation4], 0
    // Predicated region
    $region2: #{tpu_custom_call.1} parent=1 // pred_check
      _
    $region3: #{tpu_custom_call.1} parent=1 // pred_check_branch
      %23 = sbr.rel (0) target = $region5
    $region4: #{tpu_custom_call.1} parent=1 // pred_region
      %s25 = ssub.s32 32, 32
      %26 = vsyncadd [#allocation3], %s25
      %s28 = sshll.u32 [#allocation2], 4
      %s29 = int_to_ptr.vmem [resolvable:$true] %s28
      %31 = dma.hbm_to_vmem [thread:$0]  %s0, 32, %s29, [#allocation3]
    $region5: #{tpu_custom_call.1} parent=1 // pred_fallthru
      _
    // Predicated region
    $region6: #{tpu_custom_call.1} parent=1 // pred_check
      _
    $region7: #{tpu_custom_call.1} parent=1 // pred_check_branch
      %33 = sbr.rel (0) target = $region9
    $region8: #{tpu_custom_call.1} parent=1 // pred_region
      %s35 = ssub.s32 3328, 3328
      %36 = vsyncadd [#allocation6], %s35
      %s37 = sshll.u32 [#allocation5], 4
      %s38 = int_to_ptr.vmem [resolvable:$true] %s37
      %43 = dma.hbm_to_vmem [thread:$0]  %s1, 3328, %s38, [#allocation6], 256, 256, 16
    $region9: #{tpu_custom_call.1} parent=1 // pred_fallthru
      _
    // Predicated region
    $region10: #{tpu_custom_call.1} parent=1 // pred_check
      _
    $region11: #{tpu_custom_call.1} parent=1 // pred_check_branch
      %45 = sbr.rel (0) target = $region13
    $region12: #{tpu_custom_call.1} parent=1 // pred_region
      %s47 = ssub.s32 32, 32
      %48 = vsyncadd [#allocation6], %s47
      %s50 = sshll.u32 [#allocation7], 4
      %s51 = int_to_ptr.vmem [resolvable:$true] %s50
      %53 = dma.hbm_to_vmem [thread:$0]  %s2, 32, %s51, [#allocation6]
    $region13: #{tpu_custom_call.1} parent=1 // pred_fallthru
      _
    // Predicated region
    $region14: #{tpu_custom_call.1} parent=1 // pred_check
      _
    $region15: #{tpu_custom_call.1} parent=1 // pred_check_branch
      %55 = sbr.rel (0) target = $region17
    $region16: #{tpu_custom_call.1} parent=1 // pred_region
      _
    $region17: #{tpu_custom_call.1} parent=1 // pred_fallthru
      _
    // Predicated region
    $region18: #{tpu_custom_call.1} parent=1 // pred_check
      _
    $region19: #{tpu_custom_call.1} parent=1 // pred_check_branch
      %57 = sbr.rel (0) target = $region21
    $region20: #{tpu_custom_call.1} parent=1 // pred_region
      %s59 = ssub.s32 512, 512
      %60 = vsyncadd [#allocation9], %s59
      %s61 = sshll.u32 [#allocation8], 4
      %s62 = int_to_ptr.vmem [resolvable:$true] %s61
      %67 = dma.hbm_to_vmem [thread:$0]  %s4, 512, %s62, [#allocation9], 256, 256, 16
    $region21: #{tpu_custom_call.1} parent=1 // pred_fallthru
      _
    // Predicated region
    $region22: #{tpu_custom_call.1} parent=1 // pred_check
      _
    $region23: #{tpu_custom_call.1} parent=1 // pred_check_branch
      %69 = sbr.rel (0) target = $region25
    $region24: #{tpu_custom_call.1} parent=1 // pred_region
      %s71 = ssub.s32 32, 32
      %72 = vsyncadd [#allocation9], %s71
      %s74 = sshll.u32 [#allocation10], 4
      %s75 = int_to_ptr.vmem [resolvable:$true] %s74
      %77 = dma.hbm_to_vmem [thread:$0]  %s5, 32, %s75, [#allocation9]
    $region25: #{tpu_custom_call.1} parent=1 // pred_fallthru
      _
    // Predicated region
    $region26: #{tpu_custom_call.1} parent=1 // pred_check
      _
    $region27: #{tpu_custom_call.1} parent=1 // pred_check_branch
      %79 = sbr.rel (0) target = $region29
    $region28: #{tpu_custom_call.1} parent=1 // pred_region
      %s81 = ssub.s32 16384, 16384
      %82 = vsyncadd [#allocation12], %s81
      %s83 = sshll.u32 [#allocation11], 4
      %s84 = int_to_ptr.vmem [resolvable:$true] %s83
      %89 = dma.hbm_to_vmem [thread:$0]  %s6, 16384, %s84, [#allocation12], 512, 512, 32
    $region29: #{tpu_custom_call.1} parent=1 // pred_fallthru
      _
    // Predicated region
    $region30: #{tpu_custom_call.1} parent=1 // pred_check
      _
    $region31: #{tpu_custom_call.1} parent=1 // pred_check_branch
      %91 = sbr.rel (0) target = $region33
    $region32: #{tpu_custom_call.1} parent=1 // pred_region
      _
    $region33: #{tpu_custom_call.1} parent=1 // pred_fallthru
      _
    // Predicated region
    $region34: #{tpu_custom_call.1} parent=1 // pred_check
      _
    $region35: #{tpu_custom_call.1} parent=1 // pred_check_branch
      %93 = sbr.rel (0) target = $region37
    $region36: #{tpu_custom_call.1} parent=1 // pred_region
      %s95 = ssub.s32 512, 512
      %96 = vsyncadd [#allocation12], %s95
      %s98 = sshll.u32 [#allocation13], 4
      %s99 = int_to_ptr.vmem [resolvable:$true] %s98
      %101 = dma.hbm_to_vmem [thread:$0]  %s8, 512, %s99, [#allocation12]
    $region37: #{tpu_custom_call.1} parent=1 // pred_fallthru
      _
    // Predicated region
    $region38: #{tpu_custom_call.1} parent=1 // pred_check
      _
    $region39: #{tpu_custom_call.1} parent=1 // pred_check_branch
      %103 = sbr.rel (0) target = $region41
    $region40: #{tpu_custom_call.1} parent=1 // pred_region
      %s105 = ssub.s32 32, 32
      %106 = vsyncadd [#allocation15], %s105
      %s108 = sshll.u32 [#allocation14], 4
      %s109 = int_to_ptr.vmem [resolvable:$true] %s108
      %111 = dma.hbm_to_vmem [thread:$0]  %s9, 32, %s109, [#allocation15]
    $region41: #{tpu_custom_call.1} parent=1 // pred_fallthru
      _
    // Predicated region
    $region42: #{tpu_custom_call.1} parent=1 // pred_check
      _
    $region43: #{tpu_custom_call.1} parent=1 // pred_check_branch
      %113 = sbr.rel (0) target = $region45
    $region44: #{tpu_custom_call.1} parent=1 // pred_region
      %s115 = ssub.s32 49152, 49152
      %116 = vsyncadd [#allocation15], %s115
      %s117 = sshll.u32 [#allocation16], 4
      %s118 = int_to_ptr.vmem [resolvable:$true] %s117
      %123 = dma.hbm_to_vmem [thread:$0]  %s10, 49152, %s118, [#allocation15], 768, 768, 48
    $region45: #{tpu_custom_call.1} parent=1 // pred_fallthru
      _
    // Predicated region
    $region46: #{tpu_custom_call.1} parent=1 // pred_check
      _
    $region47: #{tpu_custom_call.1} parent=1 // pred_check_branch
      %125 = sbr.rel (0) target = $region49
    $region48: #{tpu_custom_call.1} parent=1 // pred_region
      %126 = dma.done [#allocation3], 32
    $region49: #{tpu_custom_call.1} parent=1 // pred_fallthru
      _
    // Predicated region
    $region50: #{tpu_custom_call.1} parent=1 // pred_check
      _
    $region51: #{tpu_custom_call.1} parent=1 // pred_check_branch
      %128 = sbr.rel (0) target = $region53
    $region52: #{tpu_custom_call.1} parent=1 // pred_region
      %129 = dma.done [#allocation6], 3328
    $region53: #{tpu_custom_call.1} parent=1 // pred_fallthru
      _
    // Predicated region
    $region54: #{tpu_custom_call.1} parent=1 // pred_check
      _
    $region55: #{tpu_custom_call.1} parent=1 // pred_check_branch
      %131 = sbr.rel (0) target = $region57
    $region56: #{tpu_custom_call.1} parent=1 // pred_region
      %132 = dma.done [#allocation6], 32
    $region57: #{tpu_custom_call.1} parent=1 // pred_fallthru
      _
    // Predicated region
    $region58: #{tpu_custom_call.1} parent=1 // pred_check
      _
    $region59: #{tpu_custom_call.1} parent=1 // pred_check_branch
      %134 = sbr.rel (0) target = $region61
    $region60: #{tpu_custom_call.1} parent=1 // pred_region
      %135 = dma.done [#allocation9], 512
    $region61: #{tpu_custom_call.1} parent=1 // pred_fallthru
      _
    // Predicated region
    $region62: #{tpu_custom_call.1} parent=1 // pred_check
      _
    $region63: #{tpu_custom_call.1} parent=1 // pred_check_branch
      %137 = sbr.rel (0) target = $region65
    $region64: #{tpu_custom_call.1} parent=1 // pred_region
      %138 = dma.done [#allocation9], 32
    $region65: #{tpu_custom_call.1} parent=1 // pred_fallthru
      _
    // Predicated region
    $region66: #{tpu_custom_call.1} parent=1 // pred_check
      _
    $region67: #{tpu_custom_call.1} parent=1 // pred_check_branch
      %140 = sbr.rel (0) target = $region69
    $region68: #{tpu_custom_call.1} parent=1 // pred_region
      %141 = dma.done [#allocation12], 16384
    $region69: #{tpu_custom_call.1} parent=1 // pred_fallthru
      _
    // Predicated region
    $region70: #{tpu_custom_call.1} parent=1 // pred_check
      _
    $region71: #{tpu_custom_call.1} parent=1 // pred_check_branch
      %143 = sbr.rel (0) target = $region73
    $region72: #{tpu_custom_call.1} parent=1 // pred_region
      %144 = dma.done [#allocation12], 512
    $region73: #{tpu_custom_call.1} parent=1 // pred_fallthru
      _
    // Predicated region
    $region74: #{tpu_custom_call.1} parent=1 // pred_check
      _
    $region75: #{tpu_custom_call.1} parent=1 // pred_check_branch
      %146 = sbr.rel (0) target = $region77
    $region76: #{tpu_custom_call.1} parent=1 // pred_region
      %147 = dma.done [#allocation15], 32
    $region77: #{tpu_custom_call.1} parent=1 // pred_fallthru
      _
    // Predicated region
    $region78: #{tpu_custom_call.1} parent=1 // pred_check
      _
    $region79: #{tpu_custom_call.1} parent=1 // pred_check_branch
      %149 = sbr.rel (0) target = $region81
    $region80: #{tpu_custom_call.1} parent=1 // pred_region
      %150 = dma.done [#allocation15], 49152
    $region81: #{tpu_custom_call.1} parent=1 // pred_fallthru
      _
    %v151 = vld [vmem:[#allocation2] sm:$0x3]
    %v152 = vld [vmem:[#allocation5] sm:$0xff]
    %v153 = vld [vmem:[#allocation5 + $0x8] sm:$0xff]
    %v154 = vld [vmem:[#allocation5 + $0x10] sm:$0xff]
    %v155 = vld [vmem:[#allocation5 + $0x18] sm:$0xff]
    %v156 = vld [vmem:[#allocation5 + $0x20] sm:$0xff]
    %v157 = vld [vmem:[#allocation5 + $0x28] sm:$0xff]
    %v158 = vld [vmem:[#allocation5 + $0x30] sm:$0xff]
    %v159 = vld [vmem:[#allocation5 + $0x38] sm:$0xff]
    %v160 = vld [vmem:[#allocation5 + $0x40] sm:$0xff]
    %v161 = vld [vmem:[#allocation5 + $0x48] sm:$0xff]
    %v162 = vld [vmem:[#allocation5 + $0x50] sm:$0xff]
    %v163 = vld [vmem:[#allocation5 + $0x58] sm:$0xff]
    %v164 = vld [vmem:[#allocation5 + $0x60] sm:$0xff]
    %v165 = vld [vmem:[#allocation5 + $0x68] sm:$0xff]
    %v166 = vld [vmem:[#allocation5 + $0x70] sm:$0xff]
    %v167 = vld [vmem:[#allocation5 + $0x78] sm:$0xff]
    %v168 = vld [vmem:[#allocation5 + $0x80] sm:$0xff]
    %v169 = vld [vmem:[#allocation5 + $0x88] sm:$0xff]
    %v170 = vld [vmem:[#allocation5 + $0x90] sm:$0xff]
    %v171 = vld [vmem:[#allocation5 + $0x98] sm:$0xff]
    %v172 = vld [vmem:[#allocation5 + $0xa0] sm:$0xff]
    %v173 = vld [vmem:[#allocation5 + $0xa8] sm:$0xff]
    %v174 = vld [vmem:[#allocation5 + $0xb0] sm:$0xff]
    %v175 = vld [vmem:[#allocation5 + $0xb8] sm:$0xff]
    %v176 = vld [vmem:[#allocation5 + $0xc0] sm:$0xf]
    %v177 = vld [vmem:[#allocation5 + $0xc8] sm:$0xf]
    %v178 = vld [vmem:[#allocation7] sm:$0x3]
    %v180 = vlaneseq
    %v181 = vshrl.u32 %v180, 7
    %v182 = vsub.s32 0, %v181
    %v183 = vrot.slane %v178, %v182
    %v184 = vlaneseq
    %v185 = vshrl.u32 %v184, 7
    %v186 = vsub.s32 1, %v185
    %v187 = vrot.slane %v178, %v186
    %vm190 = vcmask 818176
    %v192 = vsel %vm190, %v151, 0
    %vm194 = vcmask 1043456
    %v196 = vsel %vm194, %v176, 0
    %v199 = vsel %vm194, %v177, 0
    %201 = vmatprep.subr.mxu0 %v153
    %202 = vmatpush1.msra.mxu0 %v152
    %203 = vmatprep.subr.mxu0 %v155
    %204 = vmatpush1.msra.mxu0 %v154
    %205 = vmatprep.subr.mxu0 %v157
    %206 = vmatpush1.msra.mxu0 %v156
    %207 = vmatprep.subr.mxu0 %v159
    %208 = vmatpush1.msra.mxu0 %v158
    %209 = vmatprep.subr.mxu0 %v161
    %210 = vmatpush1.msra.mxu0 %v160
    %211 = vmatprep.subr.mxu0 %v163
    %212 = vmatpush1.msra.mxu0 %v162
    %213 = vmatprep.subr.mxu0 %v165
    %214 = vmatpush1.msra.mxu0 %v164
    %215 = vmatprep.subr.mxu0 %v167
    %216 = vmatpush1.msra.mxu0 %v166
    %217 = vmatprep.subr.mxu0 %v169
    %218 = vmatpush1.msra.mxu0 %v168
    %219 = vmatprep.subr.mxu0 %v171
    %220 = vmatpush1.msra.mxu0 %v170
    %221 = vmatprep.subr.mxu0 %v173
    %222 = vmatpush1.msra.mxu0 %v172
    %223 = vmatprep.subr.mxu0 %v175
    %224 = vmatpush1.msra.mxu0 %v174
    %225 = vmatprep.subr.mxu0 %v199
    %226 = vmatpush1.msra.mxu0 %v196
    %227 = vmatprep.subr.mxu0 0.0
    %228 = vmatpush1.msra.mxu0 0.0
    %229 = vmatprep.subr.mxu0 0.0
    %230 = vmatpush1.msra.mxu0 0.0
    %231 = vmatprep.subr.mxu0 0.0
    %232 = vmatpush1.msra.mxu0 0.0
    %233 = vmatprep.subr.mxu0 0.0
    %234 = vmatpush1.msra.mxu0 0.0
    %235 = vmatprep.subr.mxu0 0.0
    %236 = vmatpush1.msra.mxu0 0.0
    %237 = vmatprep.subr.mxu0 0.0
    %238 = vmatpush1.msra.mxu0 0.0
    %239 = vmatprep.subr.mxu0 0.0
    %240 = vmatpush1.msra.mxu0 0.0
    %241 = vmatprep.subr.mxu0 0.0
    %242 = vmatpush1.msra.mxu0 0.0
    %243 = vmatprep.subr.mxu0 0.0
    %244 = vmatpush1.msra.mxu0 0.0
    %245 = vmatprep.subr.mxu0 0.0
    %246 = vmatpush1.msra.mxu0 0.0
    %247 = vmatprep.subr.mxu0 0.0
    %248 = vmatpush1.msra.mxu0 0.0
    %249 = vmatprep.subr.mxu0 0.0
    %250 = vmatpush1.msra.mxu0 0.0
    %251 = vmatprep.subr.mxu0 0.0
    %252 = vmatpush1.msra.mxu0 0.0
    %253 = vmatprep.subr.mxu0 0.0
    %254 = vmatpush1.msra.mxu0 0.0
    %255 = vmatprep.subr.mxu0 0.0
    %256 = vmatpush1.msra.mxu0 0.0
    %257 = vmatprep.subr.mxu0 0.0
    %258 = vmatpush1.msra.mxu0 0.0
    %259 = vmatprep.subr.mxu0 0.0
    %260 = vmatpush1.msra.mxu0 0.0
    %261 = vmatprep.subr.mxu0 0.0
    %262 = vmatpush1.msra.mxu0 0.0
    %263 = vmatprep.subr.mxu0 0.0
    %264 = vmatpush1.msra.mxu0 0.0
    %265 = vmatprep.mubr.f32.mxu0 0.0
    %266 = vmatmul.mubr.f32.gmra.mrb[0].mxu0 %v192
    %v267 = vpop.f32.mrb[0].mxu0
    %v268 = vadd.f32 %v183, %v267
    %v269 = vpop.f32.mrb[0].mxu0
    %v270 = vadd.f32 %v187, %v269
    %271 = vdwg.mxu0
    %v272 = vld [vmem:[%s3] sm:$0xff]
    %v273 = vld [vmem:[%s3 + $0x8] sm:$0xff]
    %v274 = vld [vmem:[%s3 + $0x10] sm:$0xff]
    %v275 = vld [vmem:[%s3 + $0x18] sm:$0xff]
    %v276 = vld [vmem:[%s3 + $0x20] sm:$0xff]
    %v277 = vld [vmem:[%s3 + $0x28] sm:$0xff]
    %v278 = vld [vmem:[%s3 + $0x30] sm:$0xff]
    %v279 = vld [vmem:[%s3 + $0x38] sm:$0xff]
    %v280 = vld [vmem:[%s3 + $0x40] sm:$0xff]
    %v281 = vld [vmem:[%s3 + $0x48] sm:$0xff]
    %v282 = vld [vmem:[%s3 + $0x50] sm:$0xff]
    %v283 = vld [vmem:[%s3 + $0x58] sm:$0xff]
    %v284 = vld [vmem:[%s3 + $0x60] sm:$0xff]
    %v285 = vld [vmem:[%s3 + $0x68] sm:$0xff]
    %v286 = vld [vmem:[%s3 + $0x70] sm:$0xff]
    %v287 = vld [vmem:[%s3 + $0x78] sm:$0xff]
    %v288 = vld [vmem:[%s3 + $0x80] sm:$0xff]
    %v289 = vld [vmem:[%s3 + $0x88] sm:$0xff]
    %v290 = vld [vmem:[%s3 + $0x90] sm:$0xff]
    %v291 = vld [vmem:[%s3 + $0x98] sm:$0xff]
    %v292 = vld [vmem:[%s3 + $0xa0] sm:$0xff]
    %v293 = vld [vmem:[%s3 + $0xa8] sm:$0xff]
    %v294 = vld [vmem:[%s3 + $0xb0] sm:$0xff]
    %v295 = vld [vmem:[%s3 + $0xb8] sm:$0xff]
    %v296 = vld [vmem:[%s3 + $0xc0] sm:$0xff]
    %v297 = vld [vmem:[%s3 + $0xc8] sm:$0xff]
    %v298 = vld [vmem:[%s3 + $0xd0] sm:$0xff]
    %v299 = vld [vmem:[%s3 + $0xd8] sm:$0xff]
    %v300 = vld [vmem:[%s3 + $0xe0] sm:$0xff]
    %v301 = vld [vmem:[%s3 + $0xe8] sm:$0xff]
    %v302 = vld [vmem:[%s3 + $0xf0] sm:$0xff]
    %v303 = vld [vmem:[%s3 + $0xf8] sm:$0xff]
    %304 = vmatprep.subr.mxu0 0.0
    %305 = vmatpush1.msra.mxu0 %v272
    %306 = vmatprep.subr.mxu0 0.0
    %307 = vmatpush1.msra.mxu0 %v273
    %308 = vmatprep.subr.mxu0 0.0
    %309 = vmatpush1.msra.mxu0 %v274
    %310 = vmatprep.subr.mxu0 0.0
    %311 = vmatpush1.msra.mxu0 %v275
    %312 = vmatprep.subr.mxu0 0.0
    %313 = vmatpush1.msra.mxu0 %v276
    %314 = vmatprep.subr.mxu0 0.0
    %315 = vmatpush1.msra.mxu0 %v277
    %316 = vmatprep.subr.mxu0 0.0
    %317 = vmatpush1.msra.mxu0 %v278
    %318 = vmatprep.subr.mxu0 0.0
    %319 = vmatpush1.msra.mxu0 %v279
    %320 = vmatprep.subr.mxu0 0.0
    %321 = vmatpush1.msra.mxu0 %v280
    %322 = vmatprep.subr.mxu0 0.0
    %323 = vmatpush1.msra.mxu0 %v281
    %324 = vmatprep.subr.mxu0 0.0
    %325 = vmatpush1.msra.mxu0 %v282
    %326 = vmatprep.subr.mxu0 0.0
    %327 = vmatpush1.msra.mxu0 %v283
    %328 = vmatprep.subr.mxu0 0.0
    %329 = vmatpush1.msra.mxu0 %v284
    %330 = vmatprep.subr.mxu0 0.0
    %331 = vmatpush1.msra.mxu0 %v285
    %332 = vmatprep.subr.mxu0 0.0
    %333 = vmatpush1.msra.mxu0 %v286
    %334 = vmatprep.subr.mxu0 0.0
    %335 = vmatpush1.msra.mxu0 %v287
    %336 = vmatprep.subr.mxu0 0.0
    %337 = vmatpush1.msra.mxu0 %v288
    %338 = vmatprep.subr.mxu0 0.0
    %339 = vmatpush1.msra.mxu0 %v289
    %340 = vmatprep.subr.mxu0 0.0
    %341 = vmatpush1.msra.mxu0 %v290
    %342 = vmatprep.subr.mxu0 0.0
    %343 = vmatpush1.msra.mxu0 %v291
    %344 = vmatprep.subr.mxu0 0.0
    %345 = vmatpush1.msra.mxu0 %v292
    %346 = vmatprep.subr.mxu0 0.0
    %347 = vmatpush1.msra.mxu0 %v293
    %348 = vmatprep.subr.mxu0 0.0
    %349 = vmatpush1.msra.mxu0 %v294
    %350 = vmatprep.subr.mxu0 0.0
    %351 = vmatpush1.msra.mxu0 %v295
    %352 = vmatprep.subr.mxu0 0.0
    %353 = vmatpush1.msra.mxu0 %v296
    %354 = vmatprep.subr.mxu0 0.0
    %355 = vmatpush1.msra.mxu0 %v297
    %356 = vmatprep.subr.mxu0 0.0
    %357 = vmatpush1.msra.mxu0 %v298
    %358 = vmatprep.subr.mxu0 0.0
    %359 = vmatpush1.msra.mxu0 %v299
    %360 = vmatprep.subr.mxu0 0.0
    %361 = vmatpush1.msra.mxu0 %v300
    %362 = vmatprep.subr.mxu0 0.0
    %363 = vmatpush1.msra.mxu0 %v301
    %364 = vmatprep.subr.mxu0 0.0
    %365 = vmatpush1.msra.mxu0 %v302
    %366 = vmatprep.subr.mxu0 0.0
    %367 = vmatpush1.msra.mxu0 %v303
    %368 = vmatprep.mubr.f32.mxu0 %v270
    %369 = vmatmul.mubr.f32.gmra.mrb[0].mxu0 %v268
    %v370 = vpop.f32.mrb[0].mxu0
    %v371 = vadd.f32 0.0, %v370
    %v372 = vpop.f32.mrb[0].mxu0
    %373 = vdwg.mxu0
    %v374 = vmul.f32 %v268, %v268
    %v375 = vmul.f32 %v270, %v270
    %376 = vmatprep.subr.mxu0 0.0
    %377 = vmatpush1.msra.mxu0 %v272
    %378 = vmatprep.subr.mxu0 0.0
    %379 = vmatpush1.msra.mxu0 %v273
    %380 = vmatprep.subr.mxu0 0.0
    %381 = vmatpush1.msra.mxu0 %v274
    %382 = vmatprep.subr.mxu0 0.0
    %383 = vmatpush1.msra.mxu0 %v275
    %384 = vmatprep.subr.mxu0 0.0
    %385 = vmatpush1.msra.mxu0 %v276
    %386 = vmatprep.subr.mxu0 0.0
    %387 = vmatpush1.msra.mxu0 %v277
    %388 = vmatprep.subr.mxu0 0.0
    %389 = vmatpush1.msra.mxu0 %v278
    %390 = vmatprep.subr.mxu0 0.0
    %391 = vmatpush1.msra.mxu0 %v279
    %392 = vmatprep.subr.mxu0 0.0
    %393 = vmatpush1.msra.mxu0 %v280
    %394 = vmatprep.subr.mxu0 0.0
    %395 = vmatpush1.msra.mxu0 %v281
    %396 = vmatprep.subr.mxu0 0.0
    %397 = vmatpush1.msra.mxu0 %v282
    %398 = vmatprep.subr.mxu0 0.0
    %399 = vmatpush1.msra.mxu0 %v283
    %400 = vmatprep.subr.mxu0 0.0
    %401 = vmatpush1.msra.mxu0 %v284
    %402 = vmatprep.subr.mxu0 0.0
    %403 = vmatpush1.msra.mxu0 %v285
    %404 = vmatprep.subr.mxu0 0.0
    %405 = vmatpush1.msra.mxu0 %v286
    %406 = vmatprep.subr.mxu0 0.0
    %407 = vmatpush1.msra.mxu0 %v287
    %408 = vmatprep.subr.mxu0 0.0
    %409 = vmatpush1.msra.mxu0 %v288
    %410 = vmatprep.subr.mxu0 0.0
    %411 = vmatpush1.msra.mxu0 %v289
    %412 = vmatprep.subr.mxu0 0.0
    %413 = vmatpush1.msra.mxu0 %v290
    %414 = vmatprep.subr.mxu0 0.0
    %415 = vmatpush1.msra.mxu0 %v291
    %416 = vmatprep.subr.mxu0 0.0
    %417 = vmatpush1.msra.mxu0 %v292
    %418 = vmatprep.subr.mxu0 0.0
    %419 = vmatpush1.msra.mxu0 %v293
    %420 = vmatprep.subr.mxu0 0.0
    %421 = vmatpush1.msra.mxu0 %v294
    %422 = vmatprep.subr.mxu0 0.0
    %423 = vmatpush1.msra.mxu0 %v295
    %424 = vmatprep.subr.mxu0 0.0
    %425 = vmatpush1.msra.mxu0 %v296
    %426 = vmatprep.subr.mxu0 0.0
    %427 = vmatpush1.msra.mxu0 %v297
    %428 = vmatprep.subr.mxu0 0.0
    %429 = vmatpush1.msra.mxu0 %v298
    %430 = vmatprep.subr.mxu0 0.0
    %431 = vmatpush1.msra.mxu0 %v299
    %432 = vmatprep.subr.mxu0 0.0
    %433 = vmatpush1.msra.mxu0 %v300
    %434 = vmatprep.subr.mxu0 0.0
    %435 = vmatpush1.msra.mxu0 %v301
    %436 = vmatprep.subr.mxu0 0.0
    %437 = vmatpush1.msra.mxu0 %v302
    %438 = vmatprep.subr.mxu0 0.0
    %439 = vmatpush1.msra.mxu0 %v303
    %440 = vmatprep.mubr.f32.mxu0 %v375
    %441 = vmatmul.mubr.f32.gmra.mrb[0].mxu0 %v374
    %v442 = vpop.f32.mrb[0].mxu0
    %v443 = vadd.f32 0.0, %v442
    %v444 = vpop.f32.mrb[0].mxu0
    %445 = vdwg.mxu0
    %vm446 = vcmask 123904
    %v447 = vsel %vm446, %v371, 0.0
    %v448 = vrot.slane %v447, 4
    %v449 = vadd.f32 %v447, %v448
    %v450 = vrot.slane %v449, 2
    %v451 = vadd.f32 %v449, %v450
    %v452 = vrot.slane %v451, 1
    %v453 = vadd.f32 %v451, %v452
    %v454 = vmul.f32 %v453, 0.03125
    %v455 = vsel %vm446, %v443, 0.0
    %v456 = vrot.slane %v455, 4
    %v457 = vadd.f32 %v455, %v456
    %v458 = vrot.slane %v457, 2
    %v459 = vadd.f32 %v457, %v458
    %v460 = vrot.slane %v459, 1
    %v461 = vadd.f32 %v459, %v460
    %v462 = vmul.f32 %v461, 0.03125
    %v463 = vmul.f32 %v454, %v454
    %v464 = vsub.f32 %v462, %v463
    %v465 = vadd.f32 %v464, 1e-05
    %v466 = vrsqrt.pop %v465
    %v467 = vld [vmem:[#allocation10] sm:$0x3]
    %v468 = vmul.f32 %v467, %v466
    %v469 = vmul.f32 %v454, %v468
    %v471 = vrot.slane %v469, 7
    %v473 = vsub.f32 %v467, %v471
    %v474 = vld [vmem:[#allocation8] sm:$0xff]
    %v475 = vld [vmem:[#allocation8 + $0x8] sm:$0xff]
    %v476 = vld [vmem:[#allocation8 + $0x10] sm:$0xff]
    %v477 = vld [vmem:[#allocation8 + $0x18] sm:$0xff]
    %vm478 = vcmask 130048
    %v480 = vsel %vm478, %v468, 0
    %482 = vmatprep.subr.mxu0 %v475
    %483 = vmatpush1.msra.mxu0 %v474
    %484 = vmatprep.subr.mxu0 %v477
    %485 = vmatpush1.msra.mxu0 %v476
    %486 = vmatprep.subr.mxu0 0.0
    %487 = vmatpush1.msra.mxu0 0.0
    %488 = vmatprep.subr.mxu0 0.0
    %489 = vmatpush1.msra.mxu0 0.0
    %490 = vmatprep.subr.mxu0 0.0
    %491 = vmatpush1.msra.mxu0 0.0
    %492 = vmatprep.subr.mxu0 0.0
    %493 = vmatpush1.msra.mxu0 0.0
    %494 = vmatprep.subr.mxu0 0.0
    %495 = vmatpush1.msra.mxu0 0.0
    %496 = vmatprep.subr.mxu0 0.0
    %497 = vmatpush1.msra.mxu0 0.0
    %498 = vmatprep.subr.mxu0 0.0
    %499 = vmatpush1.msra.mxu0 0.0
    %500 = vmatprep.subr.mxu0 0.0
    %501 = vmatpush1.msra.mxu0 0.0
    %502 = vmatprep.subr.mxu0 0.0
    %503 = vmatpush1.msra.mxu0 0.0
    %504 = vmatprep.subr.mxu0 0.0
    %505 = vmatpush1.msra.mxu0 0.0
    %506 = vmatprep.subr.mxu0 0.0
    %507 = vmatpush1.msra.mxu0 0.0
    %508 = vmatprep.subr.mxu0 0.0
    %509 = vmatpush1.msra.mxu0 0.0
    %510 = vmatprep.subr.mxu0 0.0
    %511 = vmatpush1.msra.mxu0 0.0
    %512 = vmatprep.subr.mxu0 0.0
    %513 = vmatpush1.msra.mxu0 0.0
    %514 = vmatprep.subr.mxu0 0.0
    %515 = vmatpush1.msra.mxu0 0.0
    %516 = vmatprep.subr.mxu0 0.0
    %517 = vmatpush1.msra.mxu0 0.0
    %518 = vmatprep.subr.mxu0 0.0
    %519 = vmatpush1.msra.mxu0 0.0
    %520 = vmatprep.subr.mxu0 0.0
    %521 = vmatpush1.msra.mxu0 0.0
    %522 = vmatprep.subr.mxu0 0.0
    %523 = vmatpush1.msra.mxu0 0.0
    %524 = vmatprep.subr.mxu0 0.0
    %525 = vmatpush1.msra.mxu0 0.0
    %526 = vmatprep.subr.mxu0 0.0
    %527 = vmatpush1.msra.mxu0 0.0
    %528 = vmatprep.subr.mxu0 0.0
    %529 = vmatpush1.msra.mxu0 0.0
    %530 = vmatprep.subr.mxu0 0.0
    %531 = vmatpush1.msra.mxu0 0.0
    %532 = vmatprep.subr.mxu0 0.0
    %533 = vmatpush1.msra.mxu0 0.0
    %534 = vmatprep.subr.mxu0 0.0
    %535 = vmatpush1.msra.mxu0 0.0
    %536 = vmatprep.subr.mxu0 0.0
    %537 = vmatpush1.msra.mxu0 0.0
    %538 = vmatprep.subr.mxu0 0.0
    %539 = vmatpush1.msra.mxu0 0.0
    %540 = vmatprep.subr.mxu0 0.0
    %541 = vmatpush1.msra.mxu0 0.0
    %542 = vmatprep.subr.mxu0 0.0
    %543 = vmatpush1.msra.mxu0 0.0
    %544 = vmatprep.subr.mxu0 0.0
    %545 = vmatpush1.msra.mxu0 0.0
    %546 = vmatprep.mubr.f32.mxu0 0.0
    %547 = vmatmul.mubr.f32.gmra.mrb[0].mxu0 %v480
    %v548 = vpop.f32.mrb[0].mxu0
    %v549 = vadd.f32 0.0, %v548
    %v550 = vpop.f32.mrb[0].mxu0
    %v551 = vadd.f32 0.0, %v550
    %552 = vdwg.mxu0
    %v554 = vrot.slane %v473, 1
    %v555 = vsel %vm478, %v554, 0
    %557 = vmatprep.subr.mxu0 %v475
    %558 = vmatpush1.msra.mxu0 %v474
    %559 = vmatprep.subr.mxu0 %v477
    %560 = vmatpush1.msra.mxu0 %v476
    %561 = vmatprep.subr.mxu0 0.0
    %562 = vmatpush1.msra.mxu0 0.0
    %563 = vmatprep.subr.mxu0 0.0
    %564 = vmatpush1.msra.mxu0 0.0
    %565 = vmatprep.subr.mxu0 0.0
    %566 = vmatpush1.msra.mxu0 0.0
    %567 = vmatprep.subr.mxu0 0.0
    %568 = vmatpush1.msra.mxu0 0.0
    %569 = vmatprep.subr.mxu0 0.0
    %570 = vmatpush1.msra.mxu0 0.0
    %571 = vmatprep.subr.mxu0 0.0
    %572 = vmatpush1.msra.mxu0 0.0
    %573 = vmatprep.subr.mxu0 0.0
    %574 = vmatpush1.msra.mxu0 0.0
    %575 = vmatprep.subr.mxu0 0.0
    %576 = vmatpush1.msra.mxu0 0.0
    %577 = vmatprep.subr.mxu0 0.0
    %578 = vmatpush1.msra.mxu0 0.0
    %579 = vmatprep.subr.mxu0 0.0
    %580 = vmatpush1.msra.mxu0 0.0
    %581 = vmatprep.subr.mxu0 0.0
    %582 = vmatpush1.msra.mxu0 0.0
    %583 = vmatprep.subr.mxu0 0.0
    %584 = vmatpush1.msra.mxu0 0.0
    %585 = vmatprep.subr.mxu0 0.0
    %586 = vmatpush1.msra.mxu0 0.0
    %587 = vmatprep.subr.mxu0 0.0
    %588 = vmatpush1.msra.mxu0 0.0
    %589 = vmatprep.subr.mxu0 0.0
    %590 = vmatpush1.msra.mxu0 0.0
    %591 = vmatprep.subr.mxu0 0.0
    %592 = vmatpush1.msra.mxu0 0.0
    %593 = vmatprep.subr.mxu0 0.0
    %594 = vmatpush1.msra.mxu0 0.0
    %595 = vmatprep.subr.mxu0 0.0
    %596 = vmatpush1.msra.mxu0 0.0
    %597 = vmatprep.subr.mxu0 0.0
    %598 = vmatpush1.msra.mxu0 0.0
    %599 = vmatprep.subr.mxu0 0.0
    %600 = vmatpush1.msra.mxu0 0.0
    %601 = vmatprep.subr.mxu0 0.0
    %602 = vmatpush1.msra.mxu0 0.0
    %603 = vmatprep.subr.mxu0 0.0
    %604 = vmatpush1.msra.mxu0 0.0
    %605 = vmatprep.subr.mxu0 0.0
    %606 = vmatpush1.msra.mxu0 0.0
    %607 = vmatprep.subr.mxu0 0.0
    %608 = vmatpush1.msra.mxu0 0.0
    %609 = vmatprep.subr.mxu0 0.0
    %610 = vmatpush1.msra.mxu0 0.0
    %611 = vmatprep.subr.mxu0 0.0
    %612 = vmatpush1.msra.mxu0 0.0
    %613 = vmatprep.subr.mxu0 0.0
    %614 = vmatpush1.msra.mxu0 0.0
    %615 = vmatprep.subr.mxu0 0.0
    %616 = vmatpush1.msra.mxu0 0.0
    %617 = vmatprep.subr.mxu0 0.0
    %618 = vmatpush1.msra.mxu0 0.0
    %619 = vmatprep.subr.mxu0 0.0
    %620 = vmatpush1.msra.mxu0 0.0
    %621 = vmatprep.mubr.f32.mxu0 0.0
    %622 = vmatmul.mubr.f32.gmra.mrb[0].mxu0 %v555
    %v623 = vpop.f32.mrb[0].mxu0
    %v624 = vadd.f32 0.0, %v623
    %v625 = vpop.f32.mrb[0].mxu0
    %v626 = vadd.f32 0.0, %v625
    %627 = vdwg.mxu0
    %v628 = vlaneseq
    %v629 = vshrl.u32 %v628, 7
    %v630 = vsub.s32 0, %v629
    %v631 = vrot.slane %v549, %v630
    %v632 = vlaneseq
    %v633 = vshrl.u32 %v632, 7
    %v634 = vsub.s32 0, %v633
    %v635 = vrot.slane %v551, %v634
    %v636 = vmul.f32 %v268, %v631
    %v637 = vmul.f32 %v270, %v635
    %v638 = vlaneseq
    %v639 = vshrl.u32 %v638, 7
    %v640 = vsub.s32 0, %v639
    %v641 = vrot.slane %v624, %v640
    %v642 = vlaneseq
    %v643 = vshrl.u32 %v642, 7
    %v644 = vsub.s32 0, %v643
    %v645 = vrot.slane %v626, %v644
    %v646 = vadd.f32 %v636, %v641
    %v647 = vadd.f32 %v637, %v645
    %v648 = vmax.f32 %v646, 0.0
    %v649 = vmax.f32 %v647, 0.0
    %v650 = vld [vmem:[#allocation11] sm:$0xff]
    %v651 = vld [vmem:[#allocation11 + $0x8] sm:$0xff]
    %v652 = vld [vmem:[#allocation11 + $0x10] sm:$0xff]
    %v653 = vld [vmem:[#allocation11 + $0x18] sm:$0xff]
    %v654 = vld [vmem:[#allocation11 + $0x20] sm:$0xff]
    %v655 = vld [vmem:[#allocation11 + $0x28] sm:$0xff]
    %v656 = vld [vmem:[#allocation11 + $0x30] sm:$0xff]
    %v657 = vld [vmem:[#allocation11 + $0x38] sm:$0xff]
    %v658 = vld [vmem:[#allocation11 + $0x40] sm:$0xff]
    %v659 = vld [vmem:[#allocation11 + $0x48] sm:$0xff]
    %v660 = vld [vmem:[#allocation11 + $0x50] sm:$0xff]
    %v661 = vld [vmem:[#allocation11 + $0x58] sm:$0xff]
    %v662 = vld [vmem:[#allocation11 + $0x60] sm:$0xff]
    %v663 = vld [vmem:[#allocation11 + $0x68] sm:$0xff]
    %v664 = vld [vmem:[#allocation11 + $0x70] sm:$0xff]
    %v665 = vld [vmem:[#allocation11 + $0x78] sm:$0xff]
    %v666 = vld [vmem:[#allocation11 + $0x80] sm:$0xff]
    %v667 = vld [vmem:[#allocation11 + $0x88] sm:$0xff]
    %v668 = vld [vmem:[#allocation11 + $0x90] sm:$0xff]
    %v669 = vld [vmem:[#allocation11 + $0x98] sm:$0xff]
    %v670 = vld [vmem:[#allocation11 + $0xa0] sm:$0xff]
    %v671 = vld [vmem:[#allocation11 + $0xa8] sm:$0xff]
    %v672 = vld [vmem:[#allocation11 + $0xb0] sm:$0xff]
    %v673 = vld [vmem:[#allocation11 + $0xb8] sm:$0xff]
    %v674 = vld [vmem:[#allocation11 + $0xc0] sm:$0xff]
    %v675 = vld [vmem:[#allocation11 + $0xc8] sm:$0xff]
    %v676 = vld [vmem:[#allocation11 + $0xd0] sm:$0xff]
    %v677 = vld [vmem:[#allocation11 + $0xd8] sm:$0xff]
    %v678 = vld [vmem:[#allocation11 + $0xe0] sm:$0xff]
    %v679 = vld [vmem:[#allocation11 + $0xe8] sm:$0xff]
    %v680 = vld [vmem:[#allocation11 + $0xf0] sm:$0xff]
    %v681 = vld [vmem:[#allocation11 + $0xf8] sm:$0xff]
    %v682 = vld [vmem:[#allocation11 + $0x100] sm:$0xff]
    %v683 = vld [vmem:[#allocation11 + $0x108] sm:$0xff]
    %v684 = vld [vmem:[#allocation11 + $0x110] sm:$0xff]
    %v685 = vld [vmem:[#allocation11 + $0x118] sm:$0xff]
    %v686 = vld [vmem:[#allocation11 + $0x120] sm:$0xff]
    %v687 = vld [vmem:[#allocation11 + $0x128] sm:$0xff]
    %v688 = vld [vmem:[#allocation11 + $0x130] sm:$0xff]
    %v689 = vld [vmem:[#allocation11 + $0x138] sm:$0xff]
    %v690 = vld [vmem:[#allocation11 + $0x140] sm:$0xff]
    %v691 = vld [vmem:[#allocation11 + $0x148] sm:$0xff]
    %v692 = vld [vmem:[#allocation11 + $0x150] sm:$0xff]
    %v693 = vld [vmem:[#allocation11 + $0x158] sm:$0xff]
    %v694 = vld [vmem:[#allocation11 + $0x160] sm:$0xff]
    %v695 = vld [vmem:[#allocation11 + $0x168] sm:$0xff]
    %v696 = vld [vmem:[#allocation11 + $0x170] sm:$0xff]
    %v697 = vld [vmem:[#allocation11 + $0x178] sm:$0xff]
    %v698 = vld [vmem:[#allocation11 + $0x180] sm:$0xff]
    %v699 = vld [vmem:[#allocation11 + $0x188] sm:$0xff]
    %v700 = vld [vmem:[#allocation11 + $0x190] sm:$0xff]
    %v701 = vld [vmem:[#allocation11 + $0x198] sm:$0xff]
    %v702 = vld [vmem:[#allocation11 + $0x1a0] sm:$0xff]
    %v703 = vld [vmem:[#allocation11 + $0x1a8] sm:$0xff]
    %v704 = vld [vmem:[#allocation11 + $0x1b0] sm:$0xff]
    %v705 = vld [vmem:[#allocation11 + $0x1b8] sm:$0xff]
    %v706 = vld [vmem:[#allocation11 + $0x1c0] sm:$0xff]
    %v707 = vld [vmem:[#allocation11 + $0x1c8] sm:$0xff]
    %v708 = vld [vmem:[#allocation11 + $0x1d0] sm:$0xff]
    %v709 = vld [vmem:[#allocation11 + $0x1d8] sm:$0xff]
    %v710 = vld [vmem:[#allocation11 + $0x1e0] sm:$0xff]
    %v711 = vld [vmem:[#allocation11 + $0x1e8] sm:$0xff]
    %v712 = vld [vmem:[#allocation11 + $0x1f0] sm:$0xff]
    %v713 = vld [vmem:[#allocation11 + $0x1f8] sm:$0xff]
    %v714 = vld [vmem:[#allocation11 + $0x200] sm:$0xff]
    %v715 = vld [vmem:[#allocation11 + $0x208] sm:$0xff]
    %v716 = vld [vmem:[#allocation11 + $0x210] sm:$0xff]
    %v717 = vld [vmem:[#allocation11 + $0x218] sm:$0xff]
    %v718 = vld [vmem:[#allocation11 + $0x220] sm:$0xff]
    %v719 = vld [vmem:[#allocation11 + $0x228] sm:$0xff]
    %v720 = vld [vmem:[#allocation11 + $0x230] sm:$0xff]
    %v721 = vld [vmem:[#allocation11 + $0x238] sm:$0xff]
    %v722 = vld [vmem:[#allocation11 + $0x240] sm:$0xff]
    %v723 = vld [vmem:[#allocation11 + $0x248] sm:$0xff]
    %v724 = vld [vmem:[#allocation11 + $0x250] sm:$0xff]
    %v725 = vld [vmem:[#allocation11 + $0x258] sm:$0xff]
    %v726 = vld [vmem:[#allocation11 + $0x260] sm:$0xff]
    %v727 = vld [vmem:[#allocation11 + $0x268] sm:$0xff]
    %v728 = vld [vmem:[#allocation11 + $0x270] sm:$0xff]
    %v729 = vld [vmem:[#allocation11 + $0x278] sm:$0xff]
    %v730 = vld [vmem:[#allocation11 + $0x280] sm:$0xff]
    %v731 = vld [vmem:[#allocation11 + $0x288] sm:$0xff]
    %v732 = vld [vmem:[#allocation11 + $0x290] sm:$0xff]
    %v733 = vld [vmem:[#allocation11 + $0x298] sm:$0xff]
    %v734 = vld [vmem:[#allocation11 + $0x2a0] sm:$0xff]
    %v735 = vld [vmem:[#allocation11 + $0x2a8] sm:$0xff]
    %v736 = vld [vmem:[#allocation11 + $0x2b0] sm:$0xff]
    %v737 = vld [vmem:[#allocation11 + $0x2b8] sm:$0xff]
    %v738 = vld [vmem:[#allocation11 + $0x2c0] sm:$0xff]
    %v739 = vld [vmem:[#allocation11 + $0x2c8] sm:$0xff]
    %v740 = vld [vmem:[#allocation11 + $0x2d0] sm:$0xff]
    %v741 = vld [vmem:[#allocation11 + $0x2d8] sm:$0xff]
    %v742 = vld [vmem:[#allocation11 + $0x2e0] sm:$0xff]
    %v743 = vld [vmem:[#allocation11 + $0x2e8] sm:$0xff]
    %v744 = vld [vmem:[#allocation11 + $0x2f0] sm:$0xff]
    %v745 = vld [vmem:[#allocation11 + $0x2f8] sm:$0xff]
    %v746 = vld [vmem:[#allocation11 + $0x300] sm:$0xff]
    %v747 = vld [vmem:[#allocation11 + $0x308] sm:$0xff]
    %v748 = vld [vmem:[#allocation11 + $0x310] sm:$0xff]
    %v749 = vld [vmem:[#allocation11 + $0x318] sm:$0xff]
    %v750 = vld [vmem:[#allocation11 + $0x320] sm:$0xff]
    %v751 = vld [vmem:[#allocation11 + $0x328] sm:$0xff]
    %v752 = vld [vmem:[#allocation11 + $0x330] sm:$0xff]
    %v753 = vld [vmem:[#allocation11 + $0x338] sm:$0xff]
    %v754 = vld [vmem:[#allocation11 + $0x340] sm:$0xff]
    %v755 = vld [vmem:[#allocation11 + $0x348] sm:$0xff]
    %v756 = vld [vmem:[#allocation11 + $0x350] sm:$0xff]
    %v757 = vld [vmem:[#allocation11 + $0x358] sm:$0xff]
    %v758 = vld [vmem:[#allocation11 + $0x360] sm:$0xff]
    %v759 = vld [vmem:[#allocation11 + $0x368] sm:$0xff]
    %v760 = vld [vmem:[#allocation11 + $0x370] sm:$0xff]
    %v761 = vld [vmem:[#allocation11 + $0x378] sm:$0xff]
    %v762 = vld [vmem:[#allocation11 + $0x380] sm:$0xff]
    %v763 = vld [vmem:[#allocation11 + $0x388] sm:$0xff]
    %v764 = vld [vmem:[#allocation11 + $0x390] sm:$0xff]
    %v765 = vld [vmem:[#allocation11 + $0x398] sm:$0xff]
    %v766 = vld [vmem:[#allocation11 + $0x3a0] sm:$0xff]
    %v767 = vld [vmem:[#allocation11 + $0x3a8] sm:$0xff]
    %v768 = vld [vmem:[#allocation11 + $0x3b0] sm:$0xff]
    %v769 = vld [vmem:[#allocation11 + $0x3b8] sm:$0xff]
    %v770 = vld [vmem:[#allocation11 + $0x3c0] sm:$0xff]
    %v771 = vld [vmem:[#allocation11 + $0x3c8] sm:$0xff]
    %v772 = vld [vmem:[#allocation11 + $0x3d0] sm:$0xff]
    %v773 = vld [vmem:[#allocation11 + $0x3d8] sm:$0xff]
    %v774 = vld [vmem:[#allocation11 + $0x3e0] sm:$0xff]
    %v775 = vld [vmem:[#allocation11 + $0x3e8] sm:$0xff]
    %v776 = vld [vmem:[#allocation11 + $0x3f0] sm:$0xff]
    %v777 = vld [vmem:[#allocation11 + $0x3f8] sm:$0xff]
    %778 = vmatprep.subr.mxu0 %v651
    %779 = vmatpush1.msra.mxu0 %v650
    %780 = vmatprep.subr.mxu0 %v655
    %781 = vmatpush1.msra.mxu0 %v654
    %782 = vmatprep.subr.mxu0 %v659
    %783 = vmatpush1.msra.mxu0 %v658
    %784 = vmatprep.subr.mxu0 %v663
    %785 = vmatpush1.msra.mxu0 %v662
    %786 = vmatprep.subr.mxu0 %v667
    %787 = vmatpush1.msra.mxu0 %v666
    %788 = vmatprep.subr.mxu0 %v671
    %789 = vmatpush1.msra.mxu0 %v670
    %790 = vmatprep.subr.mxu0 %v675
    %791 = vmatpush1.msra.mxu0 %v674
    %792 = vmatprep.subr.mxu0 %v679
    %793 = vmatpush1.msra.mxu0 %v678
    %794 = vmatprep.subr.mxu0 %v683
    %795 = vmatpush1.msra.mxu0 %v682
    %796 = vmatprep.subr.mxu0 %v687
    %797 = vmatpush1.msra.mxu0 %v686
    %798 = vmatprep.subr.mxu0 %v691
    %799 = vmatpush1.msra.mxu0 %v690
    %800 = vmatprep.subr.mxu0 %v695
    %801 = vmatpush1.msra.mxu0 %v694
    %802 = vmatprep.subr.mxu0 %v699
    %803 = vmatpush1.msra.mxu0 %v698
    %804 = vmatprep.subr.mxu0 %v703
    %805 = vmatpush1.msra.mxu0 %v702
    %806 = vmatprep.subr.mxu0 %v707
    %807 = vmatpush1.msra.mxu0 %v706
    %808 = vmatprep.subr.mxu0 %v711
    %809 = vmatpush1.msra.mxu0 %v710
    %810 = vmatprep.subr.mxu0 %v715
    %811 = vmatpush1.msra.mxu0 %v714
    %812 = vmatprep.subr.mxu0 %v719
    %813 = vmatpush1.msra.mxu0 %v718
    %814 = vmatprep.subr.mxu0 %v723
    %815 = vmatpush1.msra.mxu0 %v722
    %816 = vmatprep.subr.mxu0 %v727
    %817 = vmatpush1.msra.mxu0 %v726
    %818 = vmatprep.subr.mxu0 %v731
    %819 = vmatpush1.msra.mxu0 %v730
    %820 = vmatprep.subr.mxu0 %v735
    %821 = vmatpush1.msra.mxu0 %v734
    %822 = vmatprep.subr.mxu0 %v739
    %823 = vmatpush1.msra.mxu0 %v738
    %824 = vmatprep.subr.mxu0 %v743
    %825 = vmatpush1.msra.mxu0 %v742
    %826 = vmatprep.subr.mxu0 %v747
    %827 = vmatpush1.msra.mxu0 %v746
    %828 = vmatprep.subr.mxu0 %v751
    %829 = vmatpush1.msra.mxu0 %v750
    %830 = vmatprep.subr.mxu0 %v755
    %831 = vmatpush1.msra.mxu0 %v754
    %832 = vmatprep.subr.mxu0 %v759
    %833 = vmatpush1.msra.mxu0 %v758
    %834 = vmatprep.subr.mxu0 %v763
    %835 = vmatpush1.msra.mxu0 %v762
    %836 = vmatprep.subr.mxu0 %v767
    %837 = vmatpush1.msra.mxu0 %v766
    %838 = vmatprep.subr.mxu0 %v771
    %839 = vmatpush1.msra.mxu0 %v770
    %840 = vmatprep.subr.mxu0 %v775
    %841 = vmatpush1.msra.mxu0 %v774
    %842 = vmatprep.mubr.f32.mxu0 %v649
    %843 = vmatmul.mubr.f32.gmra.mrb[0].mxu0 %v648
    %v844 = vpop.f32.mrb[0].mxu0
    %v845 = vadd.f32 0.0, %v844
    %v846 = vpop.f32.mrb[0].mxu0
    %v847 = vadd.f32 0.0, %v846
    %848 = vdwg.mxu0
    %849 = vmatprep.subr.mxu0 %v653
    %850 = vmatpush1.msra.mxu0 %v652
    %851 = vmatprep.subr.mxu0 %v657
    %852 = vmatpush1.msra.mxu0 %v656
    %853 = vmatprep.subr.mxu0 %v661
    %854 = vmatpush1.msra.mxu0 %v660
    %855 = vmatprep.subr.mxu0 %v665
    %856 = vmatpush1.msra.mxu0 %v664
    %857 = vmatprep.subr.mxu0 %v669
    %858 = vmatpush1.msra.mxu0 %v668
    %859 = vmatprep.subr.mxu0 %v673
    %860 = vmatpush1.msra.mxu0 %v672
    %861 = vmatprep.subr.mxu0 %v677
    %862 = vmatpush1.msra.mxu0 %v676
    %863 = vmatprep.subr.mxu0 %v681
    %864 = vmatpush1.msra.mxu0 %v680
    %865 = vmatprep.subr.mxu0 %v685
    %866 = vmatpush1.msra.mxu0 %v684
    %867 = vmatprep.subr.mxu0 %v689
    %868 = vmatpush1.msra.mxu0 %v688
    %869 = vmatprep.subr.mxu0 %v693
    %870 = vmatpush1.msra.mxu0 %v692
    %871 = vmatprep.subr.mxu0 %v697
    %872 = vmatpush1.msra.mxu0 %v696
    %873 = vmatprep.subr.mxu0 %v701
    %874 = vmatpush1.msra.mxu0 %v700
    %875 = vmatprep.subr.mxu0 %v705
    %876 = vmatpush1.msra.mxu0 %v704
    %877 = vmatprep.subr.mxu0 %v709
    %878 = vmatpush1.msra.mxu0 %v708
    %879 = vmatprep.subr.mxu0 %v713
    %880 = vmatpush1.msra.mxu0 %v712
    %881 = vmatprep.subr.mxu0 %v717
    %882 = vmatpush1.msra.mxu0 %v716
    %883 = vmatprep.subr.mxu0 %v721
    %884 = vmatpush1.msra.mxu0 %v720
    %885 = vmatprep.subr.mxu0 %v725
    %886 = vmatpush1.msra.mxu0 %v724
    %887 = vmatprep.subr.mxu0 %v729
    %888 = vmatpush1.msra.mxu0 %v728
    %889 = vmatprep.subr.mxu0 %v733
    %890 = vmatpush1.msra.mxu0 %v732
    %891 = vmatprep.subr.mxu0 %v737
    %892 = vmatpush1.msra.mxu0 %v736
    %893 = vmatprep.subr.mxu0 %v741
    %894 = vmatpush1.msra.mxu0 %v740
    %895 = vmatprep.subr.mxu0 %v745
    %896 = vmatpush1.msra.mxu0 %v744
    %897 = vmatprep.subr.mxu0 %v749
    %898 = vmatpush1.msra.mxu0 %v748
    %899 = vmatprep.subr.mxu0 %v753
    %900 = vmatpush1.msra.mxu0 %v752
    %901 = vmatprep.subr.mxu0 %v757
    %902 = vmatpush1.msra.mxu0 %v756
    %903 = vmatprep.subr.mxu0 %v761
    %904 = vmatpush1.msra.mxu0 %v760
    %905 = vmatprep.subr.mxu0 %v765
    %906 = vmatpush1.msra.mxu0 %v764
    %907 = vmatprep.subr.mxu0 %v769
    %908 = vmatpush1.msra.mxu0 %v768
    %909 = vmatprep.subr.mxu0 %v773
    %910 = vmatpush1.msra.mxu0 %v772
    %911 = vmatprep.subr.mxu0 %v777
    %912 = vmatpush1.msra.mxu0 %v776
    %913 = vmatprep.mubr.f32.mxu0 %v649
    %914 = vmatmul.mubr.f32.gmra.mrb[0].mxu0 %v648
    %v915 = vpop.f32.mrb[0].mxu0
    %v916 = vadd.f32 0.0, %v915
    %v917 = vpop.f32.mrb[0].mxu0
    %v918 = vadd.f32 0.0, %v917
    %919 = vdwg.mxu0
    %v920 = vld [vmem:[%s7] sm:$0xff]
    %v921 = vld [vmem:[%s7 + $0x8] sm:$0xff]
    %v922 = vld [vmem:[%s7 + $0x10] sm:$0xff]
    %v923 = vld [vmem:[%s7 + $0x18] sm:$0xff]
    %v924 = vld [vmem:[%s7 + $0x20] sm:$0xff]
    %v925 = vld [vmem:[%s7 + $0x28] sm:$0xff]
    %v926 = vld [vmem:[%s7 + $0x30] sm:$0xff]
    %v927 = vld [vmem:[%s7 + $0x38] sm:$0xff]
    %v928 = vld [vmem:[%s7 + $0x40] sm:$0xff]
    %v929 = vld [vmem:[%s7 + $0x48] sm:$0xff]
    %v930 = vld [vmem:[%s7 + $0x50] sm:$0xff]
    %v931 = vld [vmem:[%s7 + $0x58] sm:$0xff]
    %v932 = vld [vmem:[%s7 + $0x60] sm:$0xff]
    %v933 = vld [vmem:[%s7 + $0x68] sm:$0xff]
    %v934 = vld [vmem:[%s7 + $0x70] sm:$0xff]
    %v935 = vld [vmem:[%s7 + $0x78] sm:$0xff]
    %v936 = vld [vmem:[%s7 + $0x80] sm:$0xff]
    %v937 = vld [vmem:[%s7 + $0x88] sm:$0xff]
    %v938 = vld [vmem:[%s7 + $0x90] sm:$0xff]
    %v939 = vld [vmem:[%s7 + $0x98] sm:$0xff]
    %v940 = vld [vmem:[%s7 + $0xa0] sm:$0xff]
    %v941 = vld [vmem:[%s7 + $0xa8] sm:$0xff]
    %v942 = vld [vmem:[%s7 + $0xb0] sm:$0xff]
    %v943 = vld [vmem:[%s7 + $0xb8] sm:$0xff]
    %v944 = vld [vmem:[%s7 + $0xc0] sm:$0xff]
    %v945 = vld [vmem:[%s7 + $0xc8] sm:$0xff]
    %v946 = vld [vmem:[%s7 + $0xd0] sm:$0xff]
    %v947 = vld [vmem:[%s7 + $0xd8] sm:$0xff]
    %v948 = vld [vmem:[%s7 + $0xe0] sm:$0xff]
    %v949 = vld [vmem:[%s7 + $0xe8] sm:$0xff]
    %v950 = vld [vmem:[%s7 + $0xf0] sm:$0xff]
    %v951 = vld [vmem:[%s7 + $0xf8] sm:$0xff]
    %v952 = vld [vmem:[%s7 + $0x100] sm:$0xff]
    %v953 = vld [vmem:[%s7 + $0x108] sm:$0xff]
    %v954 = vld [vmem:[%s7 + $0x110] sm:$0xff]
    %v955 = vld [vmem:[%s7 + $0x118] sm:$0xff]
    %v956 = vld [vmem:[%s7 + $0x120] sm:$0xff]
    %v957 = vld [vmem:[%s7 + $0x128] sm:$0xff]
    %v958 = vld [vmem:[%s7 + $0x130] sm:$0xff]
    %v959 = vld [vmem:[%s7 + $0x138] sm:$0xff]
    %v960 = vld [vmem:[%s7 + $0x140] sm:$0xff]
    %v961 = vld [vmem:[%s7 + $0x148] sm:$0xff]
    %v962 = vld [vmem:[%s7 + $0x150] sm:$0xff]
    %v963 = vld [vmem:[%s7 + $0x158] sm:$0xff]
    %v964 = vld [vmem:[%s7 + $0x160] sm:$0xff]
    %v965 = vld [vmem:[%s7 + $0x168] sm:$0xff]
    %v966 = vld [vmem:[%s7 + $0x170] sm:$0xff]
    %v967 = vld [vmem:[%s7 + $0x178] sm:$0xff]
    %v968 = vld [vmem:[%s7 + $0x180] sm:$0xff]
    %v969 = vld [vmem:[%s7 + $0x188] sm:$0xff]
    %v970 = vld [vmem:[%s7 + $0x190] sm:$0xff]
    %v971 = vld [vmem:[%s7 + $0x198] sm:$0xff]
    %v972 = vld [vmem:[%s7 + $0x1a0] sm:$0xff]
    %v973 = vld [vmem:[%s7 + $0x1a8] sm:$0xff]
    %v974 = vld [vmem:[%s7 + $0x1b0] sm:$0xff]
    %v975 = vld [vmem:[%s7 + $0x1b8] sm:$0xff]
    %v976 = vld [vmem:[%s7 + $0x1c0] sm:$0xff]
    %v977 = vld [vmem:[%s7 + $0x1c8] sm:$0xff]
    %v978 = vld [vmem:[%s7 + $0x1d0] sm:$0xff]
    %v979 = vld [vmem:[%s7 + $0x1d8] sm:$0xff]
    %v980 = vld [vmem:[%s7 + $0x1e0] sm:$0xff]
    %v981 = vld [vmem:[%s7 + $0x1e8] sm:$0xff]
    %v982 = vld [vmem:[%s7 + $0x1f0] sm:$0xff]
    %v983 = vld [vmem:[%s7 + $0x1f8] sm:$0xff]
    %984 = vmatprep.subr.mxu0 0.0
    %985 = vmatpush1.msra.mxu0 %v920
    %986 = vmatprep.subr.mxu0 0.0
    %987 = vmatpush1.msra.mxu0 %v921
    %988 = vmatprep.subr.mxu0 0.0
    %989 = vmatpush1.msra.mxu0 %v922
    %990 = vmatprep.subr.mxu0 0.0
    %991 = vmatpush1.msra.mxu0 %v923
    %992 = vmatprep.subr.mxu0 0.0
    %993 = vmatpush1.msra.mxu0 %v924
    %994 = vmatprep.subr.mxu0 0.0
    %995 = vmatpush1.msra.mxu0 %v925
    %996 = vmatprep.subr.mxu0 0.0
    %997 = vmatpush1.msra.mxu0 %v926
    %998 = vmatprep.subr.mxu0 0.0
    %999 = vmatpush1.msra.mxu0 %v927
    %1000 = vmatprep.subr.mxu0 0.0
    %1001 = vmatpush1.msra.mxu0 %v928
    %1002 = vmatprep.subr.mxu0 0.0
    %1003 = vmatpush1.msra.mxu0 %v929
    %1004 = vmatprep.subr.mxu0 0.0
    %1005 = vmatpush1.msra.mxu0 %v930
    %1006 = vmatprep.subr.mxu0 0.0
    %1007 = vmatpush1.msra.mxu0 %v931
    %1008 = vmatprep.subr.mxu0 0.0
    %1009 = vmatpush1.msra.mxu0 %v932
    %1010 = vmatprep.subr.mxu0 0.0
    %1011 = vmatpush1.msra.mxu0 %v933
    %1012 = vmatprep.subr.mxu0 0.0
    %1013 = vmatpush1.msra.mxu0 %v934
    %1014 = vmatprep.subr.mxu0 0.0
    %1015 = vmatpush1.msra.mxu0 %v935
    %1016 = vmatprep.subr.mxu0 0.0
    %1017 = vmatpush1.msra.mxu0 %v936
    %1018 = vmatprep.subr.mxu0 0.0
    %1019 = vmatpush1.msra.mxu0 %v937
    %1020 = vmatprep.subr.mxu0 0.0
    %1021 = vmatpush1.msra.mxu0 %v938
    %1022 = vmatprep.subr.mxu0 0.0
    %1023 = vmatpush1.msra.mxu0 %v939
    %1024 = vmatprep.subr.mxu0 0.0
    %1025 = vmatpush1.msra.mxu0 %v940
    %1026 = vmatprep.subr.mxu0 0.0
    %1027 = vmatpush1.msra.mxu0 %v941
    %1028 = vmatprep.subr.mxu0 0.0
    %1029 = vmatpush1.msra.mxu0 %v942
    %1030 = vmatprep.subr.mxu0 0.0
    %1031 = vmatpush1.msra.mxu0 %v943
    %1032 = vmatprep.subr.mxu0 0.0
    %1033 = vmatpush1.msra.mxu0 %v944
    %1034 = vmatprep.subr.mxu0 0.0
    %1035 = vmatpush1.msra.mxu0 %v945
    %1036 = vmatprep.subr.mxu0 0.0
    %1037 = vmatpush1.msra.mxu0 %v946
    %1038 = vmatprep.subr.mxu0 0.0
    %1039 = vmatpush1.msra.mxu0 %v947
    %1040 = vmatprep.subr.mxu0 0.0
    %1041 = vmatpush1.msra.mxu0 %v948
    %1042 = vmatprep.subr.mxu0 0.0
    %1043 = vmatpush1.msra.mxu0 %v949
    %1044 = vmatprep.subr.mxu0 0.0
    %1045 = vmatpush1.msra.mxu0 %v950
    %1046 = vmatprep.subr.mxu0 0.0
    %1047 = vmatpush1.msra.mxu0 %v951
    %1048 = vmatprep.mubr.f32.mxu0 %v847
    %1049 = vmatmul.mubr.f32.gmra.mrb[0].mxu0 %v845
    %v1050 = vpop.f32.mrb[0].mxu0
    %v1051 = vadd.f32 0.0, %v1050
    %v1052 = vpop.f32.mrb[0].mxu0
    %1053 = vdwg.mxu0
    %1054 = vmatprep.subr.mxu0 0.0
    %1055 = vmatpush1.msra.mxu0 %v952
    %1056 = vmatprep.subr.mxu0 0.0
    %1057 = vmatpush1.msra.mxu0 %v953
    %1058 = vmatprep.subr.mxu0 0.0
    %1059 = vmatpush1.msra.mxu0 %v954
    %1060 = vmatprep.subr.mxu0 0.0
    %1061 = vmatpush1.msra.mxu0 %v955
    %1062 = vmatprep.subr.mxu0 0.0
    %1063 = vmatpush1.msra.mxu0 %v956
    %1064 = vmatprep.subr.mxu0 0.0
    %1065 = vmatpush1.msra.mxu0 %v957
    %1066 = vmatprep.subr.mxu0 0.0
    %1067 = vmatpush1.msra.mxu0 %v958
    %1068 = vmatprep.subr.mxu0 0.0
    %1069 = vmatpush1.msra.mxu0 %v959
    %1070 = vmatprep.subr.mxu0 0.0
    %1071 = vmatpush1.msra.mxu0 %v960
    %1072 = vmatprep.subr.mxu0 0.0
    %1073 = vmatpush1.msra.mxu0 %v961
    %1074 = vmatprep.subr.mxu0 0.0
    %1075 = vmatpush1.msra.mxu0 %v962
    %1076 = vmatprep.subr.mxu0 0.0
    %1077 = vmatpush1.msra.mxu0 %v963
    %1078 = vmatprep.subr.mxu0 0.0
    %1079 = vmatpush1.msra.mxu0 %v964
    %1080 = vmatprep.subr.mxu0 0.0
    %1081 = vmatpush1.msra.mxu0 %v965
    %1082 = vmatprep.subr.mxu0 0.0
    %1083 = vmatpush1.msra.mxu0 %v966
    %1084 = vmatprep.subr.mxu0 0.0
    %1085 = vmatpush1.msra.mxu0 %v967
    %1086 = vmatprep.subr.mxu0 0.0
    %1087 = vmatpush1.msra.mxu0 %v968
    %1088 = vmatprep.subr.mxu0 0.0
    %1089 = vmatpush1.msra.mxu0 %v969
    %1090 = vmatprep.subr.mxu0 0.0
    %1091 = vmatpush1.msra.mxu0 %v970
    %1092 = vmatprep.subr.mxu0 0.0
    %1093 = vmatpush1.msra.mxu0 %v971
    %1094 = vmatprep.subr.mxu0 0.0
    %1095 = vmatpush1.msra.mxu0 %v972
    %1096 = vmatprep.subr.mxu0 0.0
    %1097 = vmatpush1.msra.mxu0 %v973
    %1098 = vmatprep.subr.mxu0 0.0
    %1099 = vmatpush1.msra.mxu0 %v974
    %1100 = vmatprep.subr.mxu0 0.0
    %1101 = vmatpush1.msra.mxu0 %v975
    %1102 = vmatprep.subr.mxu0 0.0
    %1103 = vmatpush1.msra.mxu0 %v976
    %1104 = vmatprep.subr.mxu0 0.0
    %1105 = vmatpush1.msra.mxu0 %v977
    %1106 = vmatprep.subr.mxu0 0.0
    %1107 = vmatpush1.msra.mxu0 %v978
    %1108 = vmatprep.subr.mxu0 0.0
    %1109 = vmatpush1.msra.mxu0 %v979
    %1110 = vmatprep.subr.mxu0 0.0
    %1111 = vmatpush1.msra.mxu0 %v980
    %1112 = vmatprep.subr.mxu0 0.0
    %1113 = vmatpush1.msra.mxu0 %v981
    %1114 = vmatprep.subr.mxu0 0.0
    %1115 = vmatpush1.msra.mxu0 %v982
    %1116 = vmatprep.subr.mxu0 0.0
    %1117 = vmatpush1.msra.mxu0 %v983
    %1118 = vmatprep.mubr.f32.mxu0 %v918
    %1119 = vmatmul.mubr.f32.gmra.mrb[0].mxu0 %v916
    %v1120 = vpop.f32.mrb[0].mxu0
    %v1121 = vadd.f32 %v1051, %v1120
    %v1122 = vpop.f32.mrb[0].mxu0
    %1123 = vdwg.mxu0
    %v1124 = vmul.f32 %v845, %v845
    %v1125 = vmul.f32 %v847, %v847
    %v1126 = vmul.f32 %v916, %v916
    %v1127 = vmul.f32 %v918, %v918
    %1128 = vmatprep.subr.mxu0 0.0
    %1129 = vmatpush1.msra.mxu0 %v920
    %1130 = vmatprep.subr.mxu0 0.0
    %1131 = vmatpush1.msra.mxu0 %v921
    %1132 = vmatprep.subr.mxu0 0.0
    %1133 = vmatpush1.msra.mxu0 %v922
    %1134 = vmatprep.subr.mxu0 0.0
    %1135 = vmatpush1.msra.mxu0 %v923
    %1136 = vmatprep.subr.mxu0 0.0
    %1137 = vmatpush1.msra.mxu0 %v924
    %1138 = vmatprep.subr.mxu0 0.0
    %1139 = vmatpush1.msra.mxu0 %v925
    %1140 = vmatprep.subr.mxu0 0.0
    %1141 = vmatpush1.msra.mxu0 %v926
    %1142 = vmatprep.subr.mxu0 0.0
    %1143 = vmatpush1.msra.mxu0 %v927
    %1144 = vmatprep.subr.mxu0 0.0
    %1145 = vmatpush1.msra.mxu0 %v928
    %1146 = vmatprep.subr.mxu0 0.0
    %1147 = vmatpush1.msra.mxu0 %v929
    %1148 = vmatprep.subr.mxu0 0.0
    %1149 = vmatpush1.msra.mxu0 %v930
    %1150 = vmatprep.subr.mxu0 0.0
    %1151 = vmatpush1.msra.mxu0 %v931
    %1152 = vmatprep.subr.mxu0 0.0
    %1153 = vmatpush1.msra.mxu0 %v932
    %1154 = vmatprep.subr.mxu0 0.0
    %1155 = vmatpush1.msra.mxu0 %v933
    %1156 = vmatprep.subr.mxu0 0.0
    %1157 = vmatpush1.msra.mxu0 %v934
    %1158 = vmatprep.subr.mxu0 0.0
    %1159 = vmatpush1.msra.mxu0 %v935
    %1160 = vmatprep.subr.mxu0 0.0
    %1161 = vmatpush1.msra.mxu0 %v936
    %1162 = vmatprep.subr.mxu0 0.0
    %1163 = vmatpush1.msra.mxu0 %v937
    %1164 = vmatprep.subr.mxu0 0.0
    %1165 = vmatpush1.msra.mxu0 %v938
    %1166 = vmatprep.subr.mxu0 0.0
    %1167 = vmatpush1.msra.mxu0 %v939
    %1168 = vmatprep.subr.mxu0 0.0
    %1169 = vmatpush1.msra.mxu0 %v940
    %1170 = vmatprep.subr.mxu0 0.0
    %1171 = vmatpush1.msra.mxu0 %v941
    %1172 = vmatprep.subr.mxu0 0.0
    %1173 = vmatpush1.msra.mxu0 %v942
    %1174 = vmatprep.subr.mxu0 0.0
    %1175 = vmatpush1.msra.mxu0 %v943
    %1176 = vmatprep.subr.mxu0 0.0
    %1177 = vmatpush1.msra.mxu0 %v944
    %1178 = vmatprep.subr.mxu0 0.0
    %1179 = vmatpush1.msra.mxu0 %v945
    %1180 = vmatprep.subr.mxu0 0.0
    %1181 = vmatpush1.msra.mxu0 %v946
    %1182 = vmatprep.subr.mxu0 0.0
    %1183 = vmatpush1.msra.mxu0 %v947
    %1184 = vmatprep.subr.mxu0 0.0
    %1185 = vmatpush1.msra.mxu0 %v948
    %1186 = vmatprep.subr.mxu0 0.0
    %1187 = vmatpush1.msra.mxu0 %v949
    %1188 = vmatprep.subr.mxu0 0.0
    %1189 = vmatpush1.msra.mxu0 %v950
    %1190 = vmatprep.subr.mxu0 0.0
    %1191 = vmatpush1.msra.mxu0 %v951
    %1192 = vmatprep.mubr.f32.mxu0 %v1125
    %1193 = vmatmul.mubr.f32.gmra.mrb[0].mxu0 %v1124
    %v1194 = vpop.f32.mrb[0].mxu0
    %v1195 = vadd.f32 0.0, %v1194
    %v1196 = vpop.f32.mrb[0].mxu0
    %1197 = vdwg.mxu0
    %1198 = vmatprep.subr.mxu0 0.0
    %1199 = vmatpush1.msra.mxu0 %v952
    %1200 = vmatprep.subr.mxu0 0.0
    %1201 = vmatpush1.msra.mxu0 %v953
    %1202 = vmatprep.subr.mxu0 0.0
    %1203 = vmatpush1.msra.mxu0 %v954
    %1204 = vmatprep.subr.mxu0 0.0
    %1205 = vmatpush1.msra.mxu0 %v955
    %1206 = vmatprep.subr.mxu0 0.0
    %1207 = vmatpush1.msra.mxu0 %v956
    %1208 = vmatprep.subr.mxu0 0.0
    %1209 = vmatpush1.msra.mxu0 %v957
    %1210 = vmatprep.subr.mxu0 0.0
    %1211 = vmatpush1.msra.mxu0 %v958
    %1212 = vmatprep.subr.mxu0 0.0
    %1213 = vmatpush1.msra.mxu0 %v959
    %1214 = vmatprep.subr.mxu0 0.0
    %1215 = vmatpush1.msra.mxu0 %v960
    %1216 = vmatprep.subr.mxu0 0.0
    %1217 = vmatpush1.msra.mxu0 %v961
    %1218 = vmatprep.subr.mxu0 0.0
    %1219 = vmatpush1.msra.mxu0 %v962
    %1220 = vmatprep.subr.mxu0 0.0
    %1221 = vmatpush1.msra.mxu0 %v963
    %1222 = vmatprep.subr.mxu0 0.0
    %1223 = vmatpush1.msra.mxu0 %v964
    %1224 = vmatprep.subr.mxu0 0.0
    %1225 = vmatpush1.msra.mxu0 %v965
    %1226 = vmatprep.subr.mxu0 0.0
    %1227 = vmatpush1.msra.mxu0 %v966
    %1228 = vmatprep.subr.mxu0 0.0
    %1229 = vmatpush1.msra.mxu0 %v967
    %1230 = vmatprep.subr.mxu0 0.0
    %1231 = vmatpush1.msra.mxu0 %v968
    %1232 = vmatprep.subr.mxu0 0.0
    %1233 = vmatpush1.msra.mxu0 %v969
    %1234 = vmatprep.subr.mxu0 0.0
    %1235 = vmatpush1.msra.mxu0 %v970
    %1236 = vmatprep.subr.mxu0 0.0
    %1237 = vmatpush1.msra.mxu0 %v971
    %1238 = vmatprep.subr.mxu0 0.0
    %1239 = vmatpush1.msra.mxu0 %v972
    %1240 = vmatprep.subr.mxu0 0.0
    %1241 = vmatpush1.msra.mxu0 %v973
    %1242 = vmatprep.subr.mxu0 0.0
    %1243 = vmatpush1.msra.mxu0 %v974
    %1244 = vmatprep.subr.mxu0 0.0
    %1245 = vmatpush1.msra.mxu0 %v975
    %1246 = vmatprep.subr.mxu0 0.0
    %1247 = vmatpush1.msra.mxu0 %v976
    %1248 = vmatprep.subr.mxu0 0.0
    %1249 = vmatpush1.msra.mxu0 %v977
    %1250 = vmatprep.subr.mxu0 0.0
    %1251 = vmatpush1.msra.mxu0 %v978
    %1252 = vmatprep.subr.mxu0 0.0
    %1253 = vmatpush1.msra.mxu0 %v979
    %1254 = vmatprep.subr.mxu0 0.0
    %1255 = vmatpush1.msra.mxu0 %v980
    %1256 = vmatprep.subr.mxu0 0.0
    %1257 = vmatpush1.msra.mxu0 %v981
    %1258 = vmatprep.subr.mxu0 0.0
    %1259 = vmatpush1.msra.mxu0 %v982
    %1260 = vmatprep.subr.mxu0 0.0
    %1261 = vmatpush1.msra.mxu0 %v983
    %1262 = vmatprep.mubr.f32.mxu0 %v1127
    %1263 = vmatmul.mubr.f32.gmra.mrb[0].mxu0 %v1126
    %v1264 = vpop.f32.mrb[0].mxu0
    %v1265 = vadd.f32 %v1195, %v1264
    %v1266 = vpop.f32.mrb[0].mxu0
    %1267 = vdwg.mxu0
    %vm1268 = vcmask 58368
    %v1269 = vsel %vm1268, %v1121, 0.0
    %v1270 = vrot.slane %v1269, 4
    %v1271 = vadd.f32 %v1269, %v1270
    %v1272 = vrot.slane %v1271, 2
    %v1273 = vadd.f32 %v1271, %v1272
    %v1274 = vrot.slane %v1273, 1
    %v1275 = vadd.f32 %v1273, %v1274
    %v1276 = vmul.f32 %v1275, 0.0078125
    %v1277 = vsel %vm1268, %v1265, 0.0
    %v1278 = vrot.slane %v1277, 4
    %v1279 = vadd.f32 %v1277, %v1278
    %v1280 = vrot.slane %v1279, 2
    %v1281 = vadd.f32 %v1279, %v1280
    %v1282 = vrot.slane %v1281, 1
    %v1283 = vadd.f32 %v1281, %v1282
    %v1284 = vmul.f32 %v1283, 0.0078125
    %v1285 = vmul.f32 %v1276, %v1276
    %v1286 = vsub.f32 %v1284, %v1285
    %v1287 = vadd.f32 %v1286, 1e-05
    %v1288 = vrsqrt.pop %v1287
    %v1289 = vld [vmem:[#allocation14] sm:$0x3]
    %v1290 = vmul.f32 %v1289, %v1288
    %v1291 = vmul.f32 %v1276, %v1290
    %v1293 = vrot.slane %v1291, 7
    %v1295 = vsub.f32 %v1289, %v1293
    %v1296 = vld [vmem:[#allocation13] sm:$0xff]
    %v1297 = vld [vmem:[#allocation13 + $0x8] sm:$0xff]
    %v1298 = vld [vmem:[#allocation13 + $0x10] sm:$0xff]
    %v1299 = vld [vmem:[#allocation13 + $0x18] sm:$0xff]
    %vm1300 = vcmask 64512
    %v1302 = vsel %vm1300, %v1290, 0
    %1304 = vmatprep.subr.mxu0 %v1297
    %1305 = vmatpush1.msra.mxu0 %v1296
    %1306 = vmatprep.subr.mxu0 0.0
    %1307 = vmatpush1.msra.mxu0 0.0
    %1308 = vmatprep.subr.mxu0 0.0
    %1309 = vmatpush1.msra.mxu0 0.0
    %1310 = vmatprep.subr.mxu0 0.0
    %1311 = vmatpush1.msra.mxu0 0.0
    %1312 = vmatprep.subr.mxu0 0.0
    %1313 = vmatpush1.msra.mxu0 0.0
    %1314 = vmatprep.subr.mxu0 0.0
    %1315 = vmatpush1.msra.mxu0 0.0
    %1316 = vmatprep.subr.mxu0 0.0
    %1317 = vmatpush1.msra.mxu0 0.0
    %1318 = vmatprep.subr.mxu0 0.0
    %1319 = vmatpush1.msra.mxu0 0.0
    %1320 = vmatprep.subr.mxu0 0.0
    %1321 = vmatpush1.msra.mxu0 0.0
    %1322 = vmatprep.subr.mxu0 0.0
    %1323 = vmatpush1.msra.mxu0 0.0
    %1324 = vmatprep.subr.mxu0 0.0
    %1325 = vmatpush1.msra.mxu0 0.0
    %1326 = vmatprep.subr.mxu0 0.0
    %1327 = vmatpush1.msra.mxu0 0.0
    %1328 = vmatprep.subr.mxu0 0.0
    %1329 = vmatpush1.msra.mxu0 0.0
    %1330 = vmatprep.subr.mxu0 0.0
    %1331 = vmatpush1.msra.mxu0 0.0
    %1332 = vmatprep.subr.mxu0 0.0
    %1333 = vmatpush1.msra.mxu0 0.0
    %1334 = vmatprep.subr.mxu0 0.0
    %1335 = vmatpush1.msra.mxu0 0.0
    %1336 = vmatprep.subr.mxu0 0.0
    %1337 = vmatpush1.msra.mxu0 0.0
    %1338 = vmatprep.subr.mxu0 0.0
    %1339 = vmatpush1.msra.mxu0 0.0
    %1340 = vmatprep.subr.mxu0 0.0
    %1341 = vmatpush1.msra.mxu0 0.0
    %1342 = vmatprep.subr.mxu0 0.0
    %1343 = vmatpush1.msra.mxu0 0.0
    %1344 = vmatprep.subr.mxu0 0.0
    %1345 = vmatpush1.msra.mxu0 0.0
    %1346 = vmatprep.subr.mxu0 0.0
    %1347 = vmatpush1.msra.mxu0 0.0
    %1348 = vmatprep.subr.mxu0 0.0
    %1349 = vmatpush1.msra.mxu0 0.0
    %1350 = vmatprep.subr.mxu0 0.0
    %1351 = vmatpush1.msra.mxu0 0.0
    %1352 = vmatprep.subr.mxu0 0.0
    %1353 = vmatpush1.msra.mxu0 0.0
    %1354 = vmatprep.subr.mxu0 0.0
    %1355 = vmatpush1.msra.mxu0 0.0
    %1356 = vmatprep.subr.mxu0 0.0
    %1357 = vmatpush1.msra.mxu0 0.0
    %1358 = vmatprep.subr.mxu0 0.0
    %1359 = vmatpush1.msra.mxu0 0.0
    %1360 = vmatprep.subr.mxu0 0.0
    %1361 = vmatpush1.msra.mxu0 0.0
    %1362 = vmatprep.subr.mxu0 0.0
    %1363 = vmatpush1.msra.mxu0 0.0
    %1364 = vmatprep.subr.mxu0 0.0
    %1365 = vmatpush1.msra.mxu0 0.0
    %1366 = vmatprep.subr.mxu0 0.0
    %1367 = vmatpush1.msra.mxu0 0.0
    %1368 = vmatprep.mubr.f32.mxu0 0.0
    %1369 = vmatmul.mubr.f32.gmra.mrb[0].mxu0 %v1302
    %v1370 = vpop.f32.mrb[0].mxu0
    %v1371 = vadd.f32 0.0, %v1370
    %v1372 = vpop.f32.mrb[0].mxu0
    %v1373 = vadd.f32 0.0, %v1372
    %1374 = vdwg.mxu0
    %1375 = vmatprep.subr.mxu0 %v1299
    %1376 = vmatpush1.msra.mxu0 %v1298
    %1377 = vmatprep.subr.mxu0 0.0
    %1378 = vmatpush1.msra.mxu0 0.0
    %1379 = vmatprep.subr.mxu0 0.0
    %1380 = vmatpush1.msra.mxu0 0.0
    %1381 = vmatprep.subr.mxu0 0.0
    %1382 = vmatpush1.msra.mxu0 0.0
    %1383 = vmatprep.subr.mxu0 0.0
    %1384 = vmatpush1.msra.mxu0 0.0
    %1385 = vmatprep.subr.mxu0 0.0
    %1386 = vmatpush1.msra.mxu0 0.0
    %1387 = vmatprep.subr.mxu0 0.0
    %1388 = vmatpush1.msra.mxu0 0.0
    %1389 = vmatprep.subr.mxu0 0.0
    %1390 = vmatpush1.msra.mxu0 0.0
    %1391 = vmatprep.subr.mxu0 0.0
    %1392 = vmatpush1.msra.mxu0 0.0
    %1393 = vmatprep.subr.mxu0 0.0
    %1394 = vmatpush1.msra.mxu0 0.0
    %1395 = vmatprep.subr.mxu0 0.0
    %1396 = vmatpush1.msra.mxu0 0.0
    %1397 = vmatprep.subr.mxu0 0.0
    %1398 = vmatpush1.msra.mxu0 0.0
    %1399 = vmatprep.subr.mxu0 0.0
    %1400 = vmatpush1.msra.mxu0 0.0
    %1401 = vmatprep.subr.mxu0 0.0
    %1402 = vmatpush1.msra.mxu0 0.0
    %1403 = vmatprep.subr.mxu0 0.0
    %1404 = vmatpush1.msra.mxu0 0.0
    %1405 = vmatprep.subr.mxu0 0.0
    %1406 = vmatpush1.msra.mxu0 0.0
    %1407 = vmatprep.subr.mxu0 0.0
    %1408 = vmatpush1.msra.mxu0 0.0
    %1409 = vmatprep.subr.mxu0 0.0
    %1410 = vmatpush1.msra.mxu0 0.0
    %1411 = vmatprep.subr.mxu0 0.0
    %1412 = vmatpush1.msra.mxu0 0.0
    %1413 = vmatprep.subr.mxu0 0.0
    %1414 = vmatpush1.msra.mxu0 0.0
    %1415 = vmatprep.subr.mxu0 0.0
    %1416 = vmatpush1.msra.mxu0 0.0
    %1417 = vmatprep.subr.mxu0 0.0
    %1418 = vmatpush1.msra.mxu0 0.0
    %1419 = vmatprep.subr.mxu0 0.0
    %1420 = vmatpush1.msra.mxu0 0.0
    %1421 = vmatprep.subr.mxu0 0.0
    %1422 = vmatpush1.msra.mxu0 0.0
    %1423 = vmatprep.subr.mxu0 0.0
    %1424 = vmatpush1.msra.mxu0 0.0
    %1425 = vmatprep.subr.mxu0 0.0
    %1426 = vmatpush1.msra.mxu0 0.0
    %1427 = vmatprep.subr.mxu0 0.0
    %1428 = vmatpush1.msra.mxu0 0.0
    %1429 = vmatprep.subr.mxu0 0.0
    %1430 = vmatpush1.msra.mxu0 0.0
    %1431 = vmatprep.subr.mxu0 0.0
    %1432 = vmatpush1.msra.mxu0 0.0
    %1433 = vmatprep.subr.mxu0 0.0
    %1434 = vmatpush1.msra.mxu0 0.0
    %1435 = vmatprep.subr.mxu0 0.0
    %1436 = vmatpush1.msra.mxu0 0.0
    %1437 = vmatprep.subr.mxu0 0.0
    %1438 = vmatpush1.msra.mxu0 0.0
    %1439 = vmatprep.mubr.f32.mxu0 0.0
    %1440 = vmatmul.mubr.f32.gmra.mrb[0].mxu0 %v1302
    %v1441 = vpop.f32.mrb[0].mxu0
    %v1442 = vadd.f32 0.0, %v1441
    %v1443 = vpop.f32.mrb[0].mxu0
    %v1444 = vadd.f32 0.0, %v1443
    %1445 = vdwg.mxu0
    %v1447 = vrot.slane %v1295, 1
    %v1448 = vsel %vm1300, %v1447, 0
    %1450 = vmatprep.subr.mxu0 %v1297
    %1451 = vmatpush1.msra.mxu0 %v1296
    %1452 = vmatprep.subr.mxu0 0.0
    %1453 = vmatpush1.msra.mxu0 0.0
    %1454 = vmatprep.subr.mxu0 0.0
    %1455 = vmatpush1.msra.mxu0 0.0
    %1456 = vmatprep.subr.mxu0 0.0
    %1457 = vmatpush1.msra.mxu0 0.0
    %1458 = vmatprep.subr.mxu0 0.0
    %1459 = vmatpush1.msra.mxu0 0.0
    %1460 = vmatprep.subr.mxu0 0.0
    %1461 = vmatpush1.msra.mxu0 0.0
    %1462 = vmatprep.subr.mxu0 0.0
    %1463 = vmatpush1.msra.mxu0 0.0
    %1464 = vmatprep.subr.mxu0 0.0
    %1465 = vmatpush1.msra.mxu0 0.0
    %1466 = vmatprep.subr.mxu0 0.0
    %1467 = vmatpush1.msra.mxu0 0.0
    %1468 = vmatprep.subr.mxu0 0.0
    %1469 = vmatpush1.msra.mxu0 0.0
    %1470 = vmatprep.subr.mxu0 0.0
    %1471 = vmatpush1.msra.mxu0 0.0
    %1472 = vmatprep.subr.mxu0 0.0
    %1473 = vmatpush1.msra.mxu0 0.0
    %1474 = vmatprep.subr.mxu0 0.0
    %1475 = vmatpush1.msra.mxu0 0.0
    %1476 = vmatprep.subr.mxu0 0.0
    %1477 = vmatpush1.msra.mxu0 0.0
    %1478 = vmatprep.subr.mxu0 0.0
    %1479 = vmatpush1.msra.mxu0 0.0
    %1480 = vmatprep.subr.mxu0 0.0
    %1481 = vmatpush1.msra.mxu0 0.0
    %1482 = vmatprep.subr.mxu0 0.0
    %1483 = vmatpush1.msra.mxu0 0.0
    %1484 = vmatprep.subr.mxu0 0.0
    %1485 = vmatpush1.msra.mxu0 0.0
    %1486 = vmatprep.subr.mxu0 0.0
    %1487 = vmatpush1.msra.mxu0 0.0
    %1488 = vmatprep.subr.mxu0 0.0
    %1489 = vmatpush1.msra.mxu0 0.0
    %1490 = vmatprep.subr.mxu0 0.0
    %1491 = vmatpush1.msra.mxu0 0.0
    %1492 = vmatprep.subr.mxu0 0.0
    %1493 = vmatpush1.msra.mxu0 0.0
    %1494 = vmatprep.subr.mxu0 0.0
    %1495 = vmatpush1.msra.mxu0 0.0
    %1496 = vmatprep.subr.mxu0 0.0
    %1497 = vmatpush1.msra.mxu0 0.0
    %1498 = vmatprep.subr.mxu0 0.0
    %1499 = vmatpush1.msra.mxu0 0.0
    %1500 = vmatprep.subr.mxu0 0.0
    %1501 = vmatpush1.msra.mxu0 0.0
    %1502 = vmatprep.subr.mxu0 0.0
    %1503 = vmatpush1.msra.mxu0 0.0
    %1504 = vmatprep.subr.mxu0 0.0
    %1505 = vmatpush1.msra.mxu0 0.0
    %1506 = vmatprep.subr.mxu0 0.0
    %1507 = vmatpush1.msra.mxu0 0.0
    %1508 = vmatprep.subr.mxu0 0.0
    %1509 = vmatpush1.msra.mxu0 0.0
    %1510 = vmatprep.subr.mxu0 0.0
    %1511 = vmatpush1.msra.mxu0 0.0
    %1512 = vmatprep.subr.mxu0 0.0
    %1513 = vmatpush1.msra.mxu0 0.0
    %1514 = vmatprep.mubr.f32.mxu0 0.0
    %1515 = vmatmul.mubr.f32.gmra.mrb[0].mxu0 %v1448
    %v1516 = vpop.f32.mrb[0].mxu0
    %v1517 = vadd.f32 0.0, %v1516
    %v1518 = vpop.f32.mrb[0].mxu0
    %v1519 = vadd.f32 0.0, %v1518
    %1520 = vdwg.mxu0
    %1521 = vmatprep.subr.mxu0 %v1299
    %1522 = vmatpush1.msra.mxu0 %v1298
    %1523 = vmatprep.subr.mxu0 0.0
    %1524 = vmatpush1.msra.mxu0 0.0
    %1525 = vmatprep.subr.mxu0 0.0
    %1526 = vmatpush1.msra.mxu0 0.0
    %1527 = vmatprep.subr.mxu0 0.0
    %1528 = vmatpush1.msra.mxu0 0.0
    %1529 = vmatprep.subr.mxu0 0.0
    %1530 = vmatpush1.msra.mxu0 0.0
    %1531 = vmatprep.subr.mxu0 0.0
    %1532 = vmatpush1.msra.mxu0 0.0
    %1533 = vmatprep.subr.mxu0 0.0
    %1534 = vmatpush1.msra.mxu0 0.0
    %1535 = vmatprep.subr.mxu0 0.0
    %1536 = vmatpush1.msra.mxu0 0.0
    %1537 = vmatprep.subr.mxu0 0.0
    %1538 = vmatpush1.msra.mxu0 0.0
    %1539 = vmatprep.subr.mxu0 0.0
    %1540 = vmatpush1.msra.mxu0 0.0
    %1541 = vmatprep.subr.mxu0 0.0
    %1542 = vmatpush1.msra.mxu0 0.0
    %1543 = vmatprep.subr.mxu0 0.0
    %1544 = vmatpush1.msra.mxu0 0.0
    %1545 = vmatprep.subr.mxu0 0.0
    %1546 = vmatpush1.msra.mxu0 0.0
    %1547 = vmatprep.subr.mxu0 0.0
    %1548 = vmatpush1.msra.mxu0 0.0
    %1549 = vmatprep.subr.mxu0 0.0
    %1550 = vmatpush1.msra.mxu0 0.0
    %1551 = vmatprep.subr.mxu0 0.0
    %1552 = vmatpush1.msra.mxu0 0.0
    %1553 = vmatprep.subr.mxu0 0.0
    %1554 = vmatpush1.msra.mxu0 0.0
    %1555 = vmatprep.subr.mxu0 0.0
    %1556 = vmatpush1.msra.mxu0 0.0
    %1557 = vmatprep.subr.mxu0 0.0
    %1558 = vmatpush1.msra.mxu0 0.0
    %1559 = vmatprep.subr.mxu0 0.0
    %1560 = vmatpush1.msra.mxu0 0.0
    %1561 = vmatprep.subr.mxu0 0.0
    %1562 = vmatpush1.msra.mxu0 0.0
    %1563 = vmatprep.subr.mxu0 0.0
    %1564 = vmatpush1.msra.mxu0 0.0
    %1565 = vmatprep.subr.mxu0 0.0
    %1566 = vmatpush1.msra.mxu0 0.0
    %1567 = vmatprep.subr.mxu0 0.0
    %1568 = vmatpush1.msra.mxu0 0.0
    %1569 = vmatprep.subr.mxu0 0.0
    %1570 = vmatpush1.msra.mxu0 0.0
    %1571 = vmatprep.subr.mxu0 0.0
    %1572 = vmatpush1.msra.mxu0 0.0
    %1573 = vmatprep.subr.mxu0 0.0
    %1574 = vmatpush1.msra.mxu0 0.0
    %1575 = vmatprep.subr.mxu0 0.0
    %1576 = vmatpush1.msra.mxu0 0.0
    %1577 = vmatprep.subr.mxu0 0.0
    %1578 = vmatpush1.msra.mxu0 0.0
    %1579 = vmatprep.subr.mxu0 0.0
    %1580 = vmatpush1.msra.mxu0 0.0
    %1581 = vmatprep.subr.mxu0 0.0
    %1582 = vmatpush1.msra.mxu0 0.0
    %1583 = vmatprep.subr.mxu0 0.0
    %1584 = vmatpush1.msra.mxu0 0.0
    %1585 = vmatprep.mubr.f32.mxu0 0.0
    %1586 = vmatmul.mubr.f32.gmra.mrb[0].mxu0 %v1448
    %v1587 = vpop.f32.mrb[0].mxu0
    %v1588 = vadd.f32 0.0, %v1587
    %v1589 = vpop.f32.mrb[0].mxu0
    %v1590 = vadd.f32 0.0, %v1589
    %1591 = vdwg.mxu0
    %v1592 = vlaneseq
    %v1593 = vshrl.u32 %v1592, 7
    %v1594 = vsub.s32 0, %v1593
    %v1595 = vrot.slane %v1371, %v1594
    %v1596 = vlaneseq
    %v1597 = vshrl.u32 %v1596, 7
    %v1598 = vsub.s32 0, %v1597
    %v1599 = vrot.slane %v1373, %v1598
    %v1600 = vlaneseq
    %v1601 = vshrl.u32 %v1600, 7
    %v1602 = vsub.s32 0, %v1601
    %v1603 = vrot.slane %v1442, %v1602
    %v1604 = vlaneseq
    %v1605 = vshrl.u32 %v1604, 7
    %v1606 = vsub.s32 0, %v1605
    %v1607 = vrot.slane %v1444, %v1606
    %v1608 = vmul.f32 %v845, %v1595
    %v1609 = vmul.f32 %v847, %v1599
    %v1610 = vmul.f32 %v916, %v1603
    %v1611 = vmul.f32 %v918, %v1607
    %v1612 = vlaneseq
    %v1613 = vshrl.u32 %v1612, 7
    %v1614 = vsub.s32 0, %v1613
    %v1615 = vrot.slane %v1517, %v1614
    %v1616 = vlaneseq
    %v1617 = vshrl.u32 %v1616, 7
    %v1618 = vsub.s32 0, %v1617
    %v1619 = vrot.slane %v1519, %v1618
    %v1620 = vlaneseq
    %v1621 = vshrl.u32 %v1620, 7
    %v1622 = vsub.s32 0, %v1621
    %v1623 = vrot.slane %v1588, %v1622
    %v1624 = vlaneseq
    %v1625 = vshrl.u32 %v1624, 7
    %v1626 = vsub.s32 0, %v1625
    %v1627 = vrot.slane %v1590, %v1626
    %v1628 = vadd.f32 %v1608, %v1615
    %v1629 = vadd.f32 %v1609, %v1619
    %v1630 = vadd.f32 %v1610, %v1623
    %v1631 = vadd.f32 %v1611, %v1627
    %v1632 = vmax.f32 %v1628, 0.0
    %v1633 = vmax.f32 %v1629, 0.0
    %v1634 = vmax.f32 %v1630, 0.0
    %v1635 = vmax.f32 %v1631, 0.0
    %v1636 = vld [vmem:[#allocation16] sm:$0xff]
    %v1637 = vld [vmem:[#allocation16 + $0x8] sm:$0xff]
    %v1638 = vld [vmem:[#allocation16 + $0x10] sm:$0xff]
    %v1639 = vld [vmem:[#allocation16 + $0x18] sm:$0xff]
    %v1640 = vld [vmem:[#allocation16 + $0x20] sm:$0xff]
    %v1641 = vld [vmem:[#allocation16 + $0x28] sm:$0xff]
    %v1642 = vld [vmem:[#allocation16 + $0x30] sm:$0xff]
    %v1643 = vld [vmem:[#allocation16 + $0x38] sm:$0xff]
    %v1644 = vld [vmem:[#allocation16 + $0x40] sm:$0xff]
    %v1645 = vld [vmem:[#allocation16 + $0x48] sm:$0xff]
    %v1646 = vld [vmem:[#allocation16 + $0x50] sm:$0xff]
    %v1647 = vld [vmem:[#allocation16 + $0x58] sm:$0xff]
    %v1648 = vld [vmem:[#allocation16 + $0x60] sm:$0xff]
    %v1649 = vld [vmem:[#allocation16 + $0x68] sm:$0xff]
    %v1650 = vld [vmem:[#allocation16 + $0x70] sm:$0xff]
    %v1651 = vld [vmem:[#allocation16 + $0x78] sm:$0xff]
    %v1652 = vld [vmem:[#allocation16 + $0x80] sm:$0xff]
    %v1653 = vld [vmem:[#allocation16 + $0x88] sm:$0xff]
    %v1654 = vld [vmem:[#allocation16 + $0x90] sm:$0xff]
    %v1655 = vld [vmem:[#allocation16 + $0x98] sm:$0xff]
    %v1656 = vld [vmem:[#allocation16 + $0xa0] sm:$0xff]
    %v1657 = vld [vmem:[#allocation16 + $0xa8] sm:$0xff]
    %v1658 = vld [vmem:[#allocation16 + $0xb0] sm:$0xff]
    %v1659 = vld [vmem:[#allocation16 + $0xb8] sm:$0xff]
    %v1660 = vld [vmem:[#allocation16 + $0xc0] sm:$0xff]
    %v1661 = vld [vmem:[#allocation16 + $0xc8] sm:$0xff]
    %v1662 = vld [vmem:[#allocation16 + $0xd0] sm:$0xff]
    %v1663 = vld [vmem:[#allocation16 + $0xd8] sm:$0xff]
    %v1664 = vld [vmem:[#allocation16 + $0xe0] sm:$0xff]
    %v1665 = vld [vmem:[#allocation16 + $0xe8] sm:$0xff]
    %v1666 = vld [vmem:[#allocation16 + $0xf0] sm:$0xff]
    %v1667 = vld [vmem:[#allocation16 + $0xf8] sm:$0xff]
    %v1668 = vld [vmem:[#allocation16 + $0x100] sm:$0xff]
    %v1669 = vld [vmem:[#allocation16 + $0x108] sm:$0xff]
    %v1670 = vld [vmem:[#allocation16 + $0x110] sm:$0xff]
    %v1671 = vld [vmem:[#allocation16 + $0x118] sm:$0xff]
    %v1672 = vld [vmem:[#allocation16 + $0x120] sm:$0xff]
    %v1673 = vld [vmem:[#allocation16 + $0x128] sm:$0xff]
    %v1674 = vld [vmem:[#allocation16 + $0x130] sm:$0xff]
    %v1675 = vld [vmem:[#allocation16 + $0x138] sm:$0xff]
    %v1676 = vld [vmem:[#allocation16 + $0x140] sm:$0xff]
    %v1677 = vld [vmem:[#allocation16 + $0x148] sm:$0xff]
    %v1678 = vld [vmem:[#allocation16 + $0x150] sm:$0xff]
    %v1679 = vld [vmem:[#allocation16 + $0x158] sm:$0xff]
    %v1680 = vld [vmem:[#allocation16 + $0x160] sm:$0xff]
    %v1681 = vld [vmem:[#allocation16 + $0x168] sm:$0xff]
    %v1682 = vld [vmem:[#allocation16 + $0x170] sm:$0xff]
    %v1683 = vld [vmem:[#allocation16 + $0x178] sm:$0xff]
    %v1684 = vld [vmem:[#allocation16 + $0x180] sm:$0xff]
    %v1685 = vld [vmem:[#allocation16 + $0x188] sm:$0xff]
    %v1686 = vld [vmem:[#allocation16 + $0x190] sm:$0xff]
    %v1687 = vld [vmem:[#allocation16 + $0x198] sm:$0xff]
    %v1688 = vld [vmem:[#allocation16 + $0x1a0] sm:$0xff]
    %v1689 = vld [vmem:[#allocation16 + $0x1a8] sm:$0xff]
    %v1690 = vld [vmem:[#allocation16 + $0x1b0] sm:$0xff]
    %v1691 = vld [vmem:[#allocation16 + $0x1b8] sm:$0xff]
    %v1692 = vld [vmem:[#allocation16 + $0x1c0] sm:$0xff]
    %v1693 = vld [vmem:[#allocation16 + $0x1c8] sm:$0xff]
    %v1694 = vld [vmem:[#allocation16 + $0x1d0] sm:$0xff]
    %v1695 = vld [vmem:[#allocation16 + $0x1d8] sm:$0xff]
    %v1696 = vld [vmem:[#allocation16 + $0x1e0] sm:$0xff]
    %v1697 = vld [vmem:[#allocation16 + $0x1e8] sm:$0xff]
    %v1698 = vld [vmem:[#allocation16 + $0x1f0] sm:$0xff]
    %v1699 = vld [vmem:[#allocation16 + $0x1f8] sm:$0xff]
    %v1700 = vld [vmem:[#allocation16 + $0x200] sm:$0xff]
    %v1701 = vld [vmem:[#allocation16 + $0x208] sm:$0xff]
    %v1702 = vld [vmem:[#allocation16 + $0x210] sm:$0xff]
    %v1703 = vld [vmem:[#allocation16 + $0x218] sm:$0xff]
    %v1704 = vld [vmem:[#allocation16 + $0x220] sm:$0xff]
    %v1705 = vld [vmem:[#allocation16 + $0x228] sm:$0xff]
    %v1706 = vld [vmem:[#allocation16 + $0x230] sm:$0xff]
    %v1707 = vld [vmem:[#allocation16 + $0x238] sm:$0xff]
    %v1708 = vld [vmem:[#allocation16 + $0x240] sm:$0xff]
    %v1709 = vld [vmem:[#allocation16 + $0x248] sm:$0xff]
    %v1710 = vld [vmem:[#allocation16 + $0x250] sm:$0xff]
    %v1711 = vld [vmem:[#allocation16 + $0x258] sm:$0xff]
    %v1712 = vld [vmem:[#allocation16 + $0x260] sm:$0xff]
    %v1713 = vld [vmem:[#allocation16 + $0x268] sm:$0xff]
    %v1714 = vld [vmem:[#allocation16 + $0x270] sm:$0xff]
    %v1715 = vld [vmem:[#allocation16 + $0x278] sm:$0xff]
    %v1716 = vld [vmem:[#allocation16 + $0x280] sm:$0xff]
    %v1717 = vld [vmem:[#allocation16 + $0x288] sm:$0xff]
    %v1718 = vld [vmem:[#allocation16 + $0x290] sm:$0xff]
    %v1719 = vld [vmem:[#allocation16 + $0x298] sm:$0xff]
    %v1720 = vld [vmem:[#allocation16 + $0x2a0] sm:$0xff]
    %v1721 = vld [vmem:[#allocation16 + $0x2a8] sm:$0xff]
    %v1722 = vld [vmem:[#allocation16 + $0x2b0] sm:$0xff]
    %v1723 = vld [vmem:[#allocation16 + $0x2b8] sm:$0xff]
    %v1724 = vld [vmem:[#allocation16 + $0x2c0] sm:$0xff]
    %v1725 = vld [vmem:[#allocation16 + $0x2c8] sm:$0xff]
    %v1726 = vld [vmem:[#allocation16 + $0x2d0] sm:$0xff]
    %v1727 = vld [vmem:[#allocation16 + $0x2d8] sm:$0xff]
    %v1728 = vld [vmem:[#allocation16 + $0x2e0] sm:$0xff]
    %v1729 = vld [vmem:[#allocation16 + $0x2e8] sm:$0xff]
    %v1730 = vld [vmem:[#allocation16 + $0x2f0] sm:$0xff]
    %v1731 = vld [vmem:[#allocation16 + $0x2f8] sm:$0xff]
    %v1732 = vld [vmem:[#allocation16 + $0x300] sm:$0xff]
    %v1733 = vld [vmem:[#allocation16 + $0x308] sm:$0xff]
    %v1734 = vld [vmem:[#allocation16 + $0x310] sm:$0xff]
    %v1735 = vld [vmem:[#allocation16 + $0x318] sm:$0xff]
    %v1736 = vld [vmem:[#allocation16 + $0x320] sm:$0xff]
    %v1737 = vld [vmem:[#allocation16 + $0x328] sm:$0xff]
    %v1738 = vld [vmem:[#allocation16 + $0x330] sm:$0xff]
    %v1739 = vld [vmem:[#allocation16 + $0x338] sm:$0xff]
    %v1740 = vld [vmem:[#allocation16 + $0x340] sm:$0xff]
    %v1741 = vld [vmem:[#allocation16 + $0x348] sm:$0xff]
    %v1742 = vld [vmem:[#allocation16 + $0x350] sm:$0xff]
    %v1743 = vld [vmem:[#allocation16 + $0x358] sm:$0xff]
    %v1744 = vld [vmem:[#allocation16 + $0x360] sm:$0xff]
    %v1745 = vld [vmem:[#allocation16 + $0x368] sm:$0xff]
    %v1746 = vld [vmem:[#allocation16 + $0x370] sm:$0xff]
    %v1747 = vld [vmem:[#allocation16 + $0x378] sm:$0xff]
    %v1748 = vld [vmem:[#allocation16 + $0x380] sm:$0xff]
    %v1749 = vld [vmem:[#allocation16 + $0x388] sm:$0xff]
    %v1750 = vld [vmem:[#allocation16 + $0x390] sm:$0xff]
    %v1751 = vld [vmem:[#allocation16 + $0x398] sm:$0xff]
    %v1752 = vld [vmem:[#allocation16 + $0x3a0] sm:$0xff]
    %v1753 = vld [vmem:[#allocation16 + $0x3a8] sm:$0xff]
    %v1754 = vld [vmem:[#allocation16 + $0x3b0] sm:$0xff]
    %v1755 = vld [vmem:[#allocation16 + $0x3b8] sm:$0xff]
    %v1756 = vld [vmem:[#allocation16 + $0x3c0] sm:$0xff]
    %v1757 = vld [vmem:[#allocation16 + $0x3c8] sm:$0xff]
    %v1758 = vld [vmem:[#allocation16 + $0x3d0] sm:$0xff]
    %v1759 = vld [vmem:[#allocation16 + $0x3d8] sm:$0xff]
    %v1760 = vld [vmem:[#allocation16 + $0x3e0] sm:$0xff]
    %v1761 = vld [vmem:[#allocation16 + $0x3e8] sm:$0xff]
    %v1762 = vld [vmem:[#allocation16 + $0x3f0] sm:$0xff]
    %v1763 = vld [vmem:[#allocation16 + $0x3f8] sm:$0xff]
    %v1764 = vld [vmem:[#allocation16 + $0x400] sm:$0xff]
    %v1765 = vld [vmem:[#allocation16 + $0x408] sm:$0xff]
    %v1766 = vld [vmem:[#allocation16 + $0x410] sm:$0xff]
    %v1767 = vld [vmem:[#allocation16 + $0x418] sm:$0xff]
    %v1768 = vld [vmem:[#allocation16 + $0x420] sm:$0xff]
    %v1769 = vld [vmem:[#allocation16 + $0x428] sm:$0xff]
    %v1770 = vld [vmem:[#allocation16 + $0x430] sm:$0xff]
    %v1771 = vld [vmem:[#allocation16 + $0x438] sm:$0xff]
    %v1772 = vld [vmem:[#allocation16 + $0x440] sm:$0xff]
    %v1773 = vld [vmem:[#allocation16 + $0x448] sm:$0xff]
    %v1774 = vld [vmem:[#allocation16 + $0x450] sm:$0xff]
    %v1775 = vld [vmem:[#allocation16 + $0x458] sm:$0xff]
    %v1776 = vld [vmem:[#allocation16 + $0x460] sm:$0xff]
    %v1777 = vld [vmem:[#allocation16 + $0x468] sm:$0xff]
    %v1778 = vld [vmem:[#allocation16 + $0x470] sm:$0xff]
    %v1779 = vld [vmem:[#allocation16 + $0x478] sm:$0xff]
    %v1780 = vld [vmem:[#allocation16 + $0x480] sm:$0xff]
    %v1781 = vld [vmem:[#allocation16 + $0x488] sm:$0xff]
    %v1782 = vld [vmem:[#allocation16 + $0x490] sm:$0xff]
    %v1783 = vld [vmem:[#allocation16 + $0x498] sm:$0xff]
    %v1784 = vld [vmem:[#allocation16 + $0x4a0] sm:$0xff]
    %v1785 = vld [vmem:[#allocation16 + $0x4a8] sm:$0xff]
    %v1786 = vld [vmem:[#allocation16 + $0x4b0] sm:$0xff]
    %v1787 = vld [vmem:[#allocation16 + $0x4b8] sm:$0xff]
    %v1788 = vld [vmem:[#allocation16 + $0x4c0] sm:$0xff]
    %v1789 = vld [vmem:[#allocation16 + $0x4c8] sm:$0xff]
    %v1790 = vld [vmem:[#allocation16 + $0x4d0] sm:$0xff]
    %v1791 = vld [vmem:[#allocation16 + $0x4d8] sm:$0xff]
    %v1792 = vld [vmem:[#allocation16 + $0x4e0] sm:$0xff]
    %v1793 = vld [vmem:[#allocation16 + $0x4e8] sm:$0xff]
    %v1794 = vld [vmem:[#allocation16 + $0x4f0] sm:$0xff]
    %v1795 = vld [vmem:[#allocation16 + $0x4f8] sm:$0xff]
    %v1796 = vld [vmem:[#allocation16 + $0x500] sm:$0xff]
    %v1797 = vld [vmem:[#allocation16 + $0x508] sm:$0xff]
    %v1798 = vld [vmem:[#allocation16 + $0x510] sm:$0xff]
    %v1799 = vld [vmem:[#allocation16 + $0x518] sm:$0xff]
    %v1800 = vld [vmem:[#allocation16 + $0x520] sm:$0xff]
    %v1801 = vld [vmem:[#allocation16 + $0x528] sm:$0xff]
    %v1802 = vld [vmem:[#allocation16 + $0x530] sm:$0xff]
    %v1803 = vld [vmem:[#allocation16 + $0x538] sm:$0xff]
    %v1804 = vld [vmem:[#allocation16 + $0x540] sm:$0xff]
    %v1805 = vld [vmem:[#allocation16 + $0x548] sm:$0xff]
    %v1806 = vld [vmem:[#allocation16 + $0x550] sm:$0xff]
    %v1807 = vld [vmem:[#allocation16 + $0x558] sm:$0xff]
    %v1808 = vld [vmem:[#allocation16 + $0x560] sm:$0xff]
    %v1809 = vld [vmem:[#allocation16 + $0x568] sm:$0xff]
    %v1810 = vld [vmem:[#allocation16 + $0x570] sm:$0xff]
    %v1811 = vld [vmem:[#allocation16 + $0x578] sm:$0xff]
    %v1812 = vld [vmem:[#allocation16 + $0x580] sm:$0xff]
    %v1813 = vld [vmem:[#allocation16 + $0x588] sm:$0xff]
    %v1814 = vld [vmem:[#allocation16 + $0x590] sm:$0xff]
    %v1815 = vld [vmem:[#allocation16 + $0x598] sm:$0xff]
    %v1816 = vld [vmem:[#allocation16 + $0x5a0] sm:$0xff]
    %v1817 = vld [vmem:[#allocation16 + $0x5a8] sm:$0xff]
    %v1818 = vld [vmem:[#allocation16 + $0x5b0] sm:$0xff]
    %v1819 = vld [vmem:[#allocation16 + $0x5b8] sm:$0xff]
    %v1820 = vld [vmem:[#allocation16 + $0x5c0] sm:$0xff]
    %v1821 = vld [vmem:[#allocation16 + $0x5c8] sm:$0xff]
    %v1822 = vld [vmem:[#allocation16 + $0x5d0] sm:$0xff]
    %v1823 = vld [vmem:[#allocation16 + $0x5d8] sm:$0xff]
    %v1824 = vld [vmem:[#allocation16 + $0x5e0] sm:$0xff]
    %v1825 = vld [vmem:[#allocation16 + $0x5e8] sm:$0xff]
    %v1826 = vld [vmem:[#allocation16 + $0x5f0] sm:$0xff]
    %v1827 = vld [vmem:[#allocation16 + $0x5f8] sm:$0xff]
    %v1828 = vld [vmem:[#allocation16 + $0x600] sm:$0xff]
    %v1829 = vld [vmem:[#allocation16 + $0x608] sm:$0xff]
    %v1830 = vld [vmem:[#allocation16 + $0x610] sm:$0xff]
    %v1831 = vld [vmem:[#allocation16 + $0x618] sm:$0xff]
    %v1832 = vld [vmem:[#allocation16 + $0x620] sm:$0xff]
    %v1833 = vld [vmem:[#allocation16 + $0x628] sm:$0xff]
    %v1834 = vld [vmem:[#allocation16 + $0x630] sm:$0xff]
    %v1835 = vld [vmem:[#allocation16 + $0x638] sm:$0xff]
    %v1836 = vld [vmem:[#allocation16 + $0x640] sm:$0xff]
    %v1837 = vld [vmem:[#allocation16 + $0x648] sm:$0xff]
    %v1838 = vld [vmem:[#allocation16 + $0x650] sm:$0xff]
    %v1839 = vld [vmem:[#allocation16 + $0x658] sm:$0xff]
    %v1840 = vld [vmem:[#allocation16 + $0x660] sm:$0xff]
    %v1841 = vld [vmem:[#allocation16 + $0x668] sm:$0xff]
    %v1842 = vld [vmem:[#allocation16 + $0x670] sm:$0xff]
    %v1843 = vld [vmem:[#allocation16 + $0x678] sm:$0xff]
    %v1844 = vld [vmem:[#allocation16 + $0x680] sm:$0xff]
    %v1845 = vld [vmem:[#allocation16 + $0x688] sm:$0xff]
    %v1846 = vld [vmem:[#allocation16 + $0x690] sm:$0xff]
    %v1847 = vld [vmem:[#allocation16 + $0x698] sm:$0xff]
    %v1848 = vld [vmem:[#allocation16 + $0x6a0] sm:$0xff]
    %v1849 = vld [vmem:[#allocation16 + $0x6a8] sm:$0xff]
    %v1850 = vld [vmem:[#allocation16 + $0x6b0] sm:$0xff]
    %v1851 = vld [vmem:[#allocation16 + $0x6b8] sm:$0xff]
    %v1852 = vld [vmem:[#allocation16 + $0x6c0] sm:$0xff]
    %v1853 = vld [vmem:[#allocation16 + $0x6c8] sm:$0xff]
    %v1854 = vld [vmem:[#allocation16 + $0x6d0] sm:$0xff]
    %v1855 = vld [vmem:[#allocation16 + $0x6d8] sm:$0xff]
    %v1856 = vld [vmem:[#allocation16 + $0x6e0] sm:$0xff]
    %v1857 = vld [vmem:[#allocation16 + $0x6e8] sm:$0xff]
    %v1858 = vld [vmem:[#allocation16 + $0x6f0] sm:$0xff]
    %v1859 = vld [vmem:[#allocation16 + $0x6f8] sm:$0xff]
    %v1860 = vld [vmem:[#allocation16 + $0x700] sm:$0xff]
    %v1861 = vld [vmem:[#allocation16 + $0x708] sm:$0xff]
    %v1862 = vld [vmem:[#allocation16 + $0x710] sm:$0xff]
    %v1863 = vld [vmem:[#allocation16 + $0x718] sm:$0xff]
    %v1864 = vld [vmem:[#allocation16 + $0x720] sm:$0xff]
    %v1865 = vld [vmem:[#allocation16 + $0x728] sm:$0xff]
    %v1866 = vld [vmem:[#allocation16 + $0x730] sm:$0xff]
    %v1867 = vld [vmem:[#allocation16 + $0x738] sm:$0xff]
    %v1868 = vld [vmem:[#allocation16 + $0x740] sm:$0xff]
    %v1869 = vld [vmem:[#allocation16 + $0x748] sm:$0xff]
    %v1870 = vld [vmem:[#allocation16 + $0x750] sm:$0xff]
    %v1871 = vld [vmem:[#allocation16 + $0x758] sm:$0xff]
    %v1872 = vld [vmem:[#allocation16 + $0x760] sm:$0xff]
    %v1873 = vld [vmem:[#allocation16 + $0x768] sm:$0xff]
    %v1874 = vld [vmem:[#allocation16 + $0x770] sm:$0xff]
    %v1875 = vld [vmem:[#allocation16 + $0x778] sm:$0xff]
    %v1876 = vld [vmem:[#allocation16 + $0x780] sm:$0xff]
    %v1877 = vld [vmem:[#allocation16 + $0x788] sm:$0xff]
    %v1878 = vld [vmem:[#allocation16 + $0x790] sm:$0xff]
    %v1879 = vld [vmem:[#allocation16 + $0x798] sm:$0xff]
    %v1880 = vld [vmem:[#allocation16 + $0x7a0] sm:$0xff]
    %v1881 = vld [vmem:[#allocation16 + $0x7a8] sm:$0xff]
    %v1882 = vld [vmem:[#allocation16 + $0x7b0] sm:$0xff]
    %v1883 = vld [vmem:[#allocation16 + $0x7b8] sm:$0xff]
    %v1884 = vld [vmem:[#allocation16 + $0x7c0] sm:$0xff]
    %v1885 = vld [vmem:[#allocation16 + $0x7c8] sm:$0xff]
    %v1886 = vld [vmem:[#allocation16 + $0x7d0] sm:$0xff]
    %v1887 = vld [vmem:[#allocation16 + $0x7d8] sm:$0xff]
    %v1888 = vld [vmem:[#allocation16 + $0x7e0] sm:$0xff]
    %v1889 = vld [vmem:[#allocation16 + $0x7e8] sm:$0xff]
    %v1890 = vld [vmem:[#allocation16 + $0x7f0] sm:$0xff]
    %v1891 = vld [vmem:[#allocation16 + $0x7f8] sm:$0xff]
    %v1892 = vld [vmem:[#allocation16 + $0x800] sm:$0xff]
    %v1893 = vld [vmem:[#allocation16 + $0x808] sm:$0xff]
    %v1894 = vld [vmem:[#allocation16 + $0x810] sm:$0xff]
    %v1895 = vld [vmem:[#allocation16 + $0x818] sm:$0xff]
    %v1896 = vld [vmem:[#allocation16 + $0x820] sm:$0xff]
    %v1897 = vld [vmem:[#allocation16 + $0x828] sm:$0xff]
    %v1898 = vld [vmem:[#allocation16 + $0x830] sm:$0xff]
    %v1899 = vld [vmem:[#allocation16 + $0x838] sm:$0xff]
    %v1900 = vld [vmem:[#allocation16 + $0x840] sm:$0xff]
    %v1901 = vld [vmem:[#allocation16 + $0x848] sm:$0xff]
    %v1902 = vld [vmem:[#allocation16 + $0x850] sm:$0xff]
    %v1903 = vld [vmem:[#allocation16 + $0x858] sm:$0xff]
    %v1904 = vld [vmem:[#allocation16 + $0x860] sm:$0xff]
    %v1905 = vld [vmem:[#allocation16 + $0x868] sm:$0xff]
    %v1906 = vld [vmem:[#allocation16 + $0x870] sm:$0xff]
    %v1907 = vld [vmem:[#allocation16 + $0x878] sm:$0xff]
    %v1908 = vld [vmem:[#allocation16 + $0x880] sm:$0xff]
    %v1909 = vld [vmem:[#allocation16 + $0x888] sm:$0xff]
    %v1910 = vld [vmem:[#allocation16 + $0x890] sm:$0xff]
    %v1911 = vld [vmem:[#allocation16 + $0x898] sm:$0xff]
    %v1912 = vld [vmem:[#allocation16 + $0x8a0] sm:$0xff]
    %v1913 = vld [vmem:[#allocation16 + $0x8a8] sm:$0xff]
    %v1914 = vld [vmem:[#allocation16 + $0x8b0] sm:$0xff]
    %v1915 = vld [vmem:[#allocation16 + $0x8b8] sm:$0xff]
    %v1916 = vld [vmem:[#allocation16 + $0x8c0] sm:$0xff]
    %v1917 = vld [vmem:[#allocation16 + $0x8c8] sm:$0xff]
    %v1918 = vld [vmem:[#allocation16 + $0x8d0] sm:$0xff]
    %v1919 = vld [vmem:[#allocation16 + $0x8d8] sm:$0xff]
    %v1920 = vld [vmem:[#allocation16 + $0x8e0] sm:$0xff]
    %v1921 = vld [vmem:[#allocation16 + $0x8e8] sm:$0xff]
    %v1922 = vld [vmem:[#allocation16 + $0x8f0] sm:$0xff]
    %v1923 = vld [vmem:[#allocation16 + $0x8f8] sm:$0xff]
    %v1924 = vld [vmem:[#allocation16 + $0x900] sm:$0xff]
    %v1925 = vld [vmem:[#allocation16 + $0x908] sm:$0xff]
    %v1926 = vld [vmem:[#allocation16 + $0x910] sm:$0xff]
    %v1927 = vld [vmem:[#allocation16 + $0x918] sm:$0xff]
    %v1928 = vld [vmem:[#allocation16 + $0x920] sm:$0xff]
    %v1929 = vld [vmem:[#allocation16 + $0x928] sm:$0xff]
    %v1930 = vld [vmem:[#allocation16 + $0x930] sm:$0xff]
    %v1931 = vld [vmem:[#allocation16 + $0x938] sm:$0xff]
    %v1932 = vld [vmem:[#allocation16 + $0x940] sm:$0xff]
    %v1933 = vld [vmem:[#allocation16 + $0x948] sm:$0xff]
    %v1934 = vld [vmem:[#allocation16 + $0x950] sm:$0xff]
    %v1935 = vld [vmem:[#allocation16 + $0x958] sm:$0xff]
    %v1936 = vld [vmem:[#allocation16 + $0x960] sm:$0xff]
    %v1937 = vld [vmem:[#allocation16 + $0x968] sm:$0xff]
    %v1938 = vld [vmem:[#allocation16 + $0x970] sm:$0xff]
    %v1939 = vld [vmem:[#allocation16 + $0x978] sm:$0xff]
    %v1940 = vld [vmem:[#allocation16 + $0x980] sm:$0xff]
    %v1941 = vld [vmem:[#allocation16 + $0x988] sm:$0xff]
    %v1942 = vld [vmem:[#allocation16 + $0x990] sm:$0xff]
    %v1943 = vld [vmem:[#allocation16 + $0x998] sm:$0xff]
    %v1944 = vld [vmem:[#allocation16 + $0x9a0] sm:$0xff]
    %v1945 = vld [vmem:[#allocation16 + $0x9a8] sm:$0xff]
    %v1946 = vld [vmem:[#allocation16 + $0x9b0] sm:$0xff]
    %v1947 = vld [vmem:[#allocation16 + $0x9b8] sm:$0xff]
    %v1948 = vld [vmem:[#allocation16 + $0x9c0] sm:$0xff]
    %v1949 = vld [vmem:[#allocation16 + $0x9c8] sm:$0xff]
    %v1950 = vld [vmem:[#allocation16 + $0x9d0] sm:$0xff]
    %v1951 = vld [vmem:[#allocation16 + $0x9d8] sm:$0xff]
    %v1952 = vld [vmem:[#allocation16 + $0x9e0] sm:$0xff]
    %v1953 = vld [vmem:[#allocation16 + $0x9e8] sm:$0xff]
    %v1954 = vld [vmem:[#allocation16 + $0x9f0] sm:$0xff]
    %v1955 = vld [vmem:[#allocation16 + $0x9f8] sm:$0xff]
    %v1956 = vld [vmem:[#allocation16 + $0xa00] sm:$0xff]
    %v1957 = vld [vmem:[#allocation16 + $0xa08] sm:$0xff]
    %v1958 = vld [vmem:[#allocation16 + $0xa10] sm:$0xff]
    %v1959 = vld [vmem:[#allocation16 + $0xa18] sm:$0xff]
    %v1960 = vld [vmem:[#allocation16 + $0xa20] sm:$0xff]
    %v1961 = vld [vmem:[#allocation16 + $0xa28] sm:$0xff]
    %v1962 = vld [vmem:[#allocation16 + $0xa30] sm:$0xff]
    %v1963 = vld [vmem:[#allocation16 + $0xa38] sm:$0xff]
    %v1964 = vld [vmem:[#allocation16 + $0xa40] sm:$0xff]
    %v1965 = vld [vmem:[#allocation16 + $0xa48] sm:$0xff]
    %v1966 = vld [vmem:[#allocation16 + $0xa50] sm:$0xff]
    %v1967 = vld [vmem:[#allocation16 + $0xa58] sm:$0xff]
    %v1968 = vld [vmem:[#allocation16 + $0xa60] sm:$0xff]
    %v1969 = vld [vmem:[#allocation16 + $0xa68] sm:$0xff]
    %v1970 = vld [vmem:[#allocation16 + $0xa70] sm:$0xff]
    %v1971 = vld [vmem:[#allocation16 + $0xa78] sm:$0xff]
    %v1972 = vld [vmem:[#allocation16 + $0xa80] sm:$0xff]
    %v1973 = vld [vmem:[#allocation16 + $0xa88] sm:$0xff]
    %v1974 = vld [vmem:[#allocation16 + $0xa90] sm:$0xff]
    %v1975 = vld [vmem:[#allocation16 + $0xa98] sm:$0xff]
    %v1976 = vld [vmem:[#allocation16 + $0xaa0] sm:$0xff]
    %v1977 = vld [vmem:[#allocation16 + $0xaa8] sm:$0xff]
    %v1978 = vld [vmem:[#allocation16 + $0xab0] sm:$0xff]
    %v1979 = vld [vmem:[#allocation16 + $0xab8] sm:$0xff]
    %v1980 = vld [vmem:[#allocation16 + $0xac0] sm:$0xff]
    %v1981 = vld [vmem:[#allocation16 + $0xac8] sm:$0xff]
    %v1982 = vld [vmem:[#allocation16 + $0xad0] sm:$0xff]
    %v1983 = vld [vmem:[#allocation16 + $0xad8] sm:$0xff]
    %v1984 = vld [vmem:[#allocation16 + $0xae0] sm:$0xff]
    %v1985 = vld [vmem:[#allocation16 + $0xae8] sm:$0xff]
    %v1986 = vld [vmem:[#allocation16 + $0xaf0] sm:$0xff]
    %v1987 = vld [vmem:[#allocation16 + $0xaf8] sm:$0xff]
    %v1988 = vld [vmem:[#allocation16 + $0xb00] sm:$0xff]
    %v1989 = vld [vmem:[#allocation16 + $0xb08] sm:$0xff]
    %v1990 = vld [vmem:[#allocation16 + $0xb10] sm:$0xff]
    %v1991 = vld [vmem:[#allocation16 + $0xb18] sm:$0xff]
    %v1992 = vld [vmem:[#allocation16 + $0xb20] sm:$0xff]
    %v1993 = vld [vmem:[#allocation16 + $0xb28] sm:$0xff]
    %v1994 = vld [vmem:[#allocation16 + $0xb30] sm:$0xff]
    %v1995 = vld [vmem:[#allocation16 + $0xb38] sm:$0xff]
    %v1996 = vld [vmem:[#allocation16 + $0xb40] sm:$0xff]
    %v1997 = vld [vmem:[#allocation16 + $0xb48] sm:$0xff]
    %v1998 = vld [vmem:[#allocation16 + $0xb50] sm:$0xff]
    %v1999 = vld [vmem:[#allocation16 + $0xb58] sm:$0xff]
    %v2000 = vld [vmem:[#allocation16 + $0xb60] sm:$0xff]
    %v2001 = vld [vmem:[#allocation16 + $0xb68] sm:$0xff]
    %v2002 = vld [vmem:[#allocation16 + $0xb70] sm:$0xff]
    %v2003 = vld [vmem:[#allocation16 + $0xb78] sm:$0xff]
    %v2004 = vld [vmem:[#allocation16 + $0xb80] sm:$0xff]
    %v2005 = vld [vmem:[#allocation16 + $0xb88] sm:$0xff]
    %v2006 = vld [vmem:[#allocation16 + $0xb90] sm:$0xff]
    %v2007 = vld [vmem:[#allocation16 + $0xb98] sm:$0xff]
    %v2008 = vld [vmem:[#allocation16 + $0xba0] sm:$0xff]
    %v2009 = vld [vmem:[#allocation16 + $0xba8] sm:$0xff]
    %v2010 = vld [vmem:[#allocation16 + $0xbb0] sm:$0xff]
    %v2011 = vld [vmem:[#allocation16 + $0xbb8] sm:$0xff]
    %v2012 = vld [vmem:[#allocation16 + $0xbc0] sm:$0xff]
    %v2013 = vld [vmem:[#allocation16 + $0xbc8] sm:$0xff]
    %v2014 = vld [vmem:[#allocation16 + $0xbd0] sm:$0xff]
    %v2015 = vld [vmem:[#allocation16 + $0xbd8] sm:$0xff]
    %v2016 = vld [vmem:[#allocation16 + $0xbe0] sm:$0xff]
    %v2017 = vld [vmem:[#allocation16 + $0xbe8] sm:$0xff]
    %v2018 = vld [vmem:[#allocation16 + $0xbf0] sm:$0xff]
    %v2019 = vld [vmem:[#allocation16 + $0xbf8] sm:$0xff]
    %2020 = vmatprep.subr.mxu0 %v1637
    %2021 = vmatpush1.msra.mxu0 %v1636
    %2022 = vmatprep.subr.mxu0 %v1643
    %2023 = vmatpush1.msra.mxu0 %v1642
    %2024 = vmatprep.subr.mxu0 %v1649
    %2025 = vmatpush1.msra.mxu0 %v1648
    %2026 = vmatprep.subr.mxu0 %v1655
    %2027 = vmatpush1.msra.mxu0 %v1654
    %2028 = vmatprep.subr.mxu0 %v1661
    %2029 = vmatpush1.msra.mxu0 %v1660
    %2030 = vmatprep.subr.mxu0 %v1667
    %2031 = vmatpush1.msra.mxu0 %v1666
    %2032 = vmatprep.subr.mxu0 %v1673
    %2033 = vmatpush1.msra.mxu0 %v1672
    %2034 = vmatprep.subr.mxu0 %v1679
    %2035 = vmatpush1.msra.mxu0 %v1678
    %2036 = vmatprep.subr.mxu0 %v1685
    %2037 = vmatpush1.msra.mxu0 %v1684
    %2038 = vmatprep.subr.mxu0 %v1691
    %2039 = vmatpush1.msra.mxu0 %v1690
    %2040 = vmatprep.subr.mxu0 %v1697
    %2041 = vmatpush1.msra.mxu0 %v1696
    %2042 = vmatprep.subr.mxu0 %v1703
    %2043 = vmatpush1.msra.mxu0 %v1702
    %2044 = vmatprep.subr.mxu0 %v1709
    %2045 = vmatpush1.msra.mxu0 %v1708
    %2046 = vmatprep.subr.mxu0 %v1715
    %2047 = vmatpush1.msra.mxu0 %v1714
    %2048 = vmatprep.subr.mxu0 %v1721
    %2049 = vmatpush1.msra.mxu0 %v1720
    %2050 = vmatprep.subr.mxu0 %v1727
    %2051 = vmatpush1.msra.mxu0 %v1726
    %2052 = vmatprep.subr.mxu0 %v1733
    %2053 = vmatpush1.msra.mxu0 %v1732
    %2054 = vmatprep.subr.mxu0 %v1739
    %2055 = vmatpush1.msra.mxu0 %v1738
    %2056 = vmatprep.subr.mxu0 %v1745
    %2057 = vmatpush1.msra.mxu0 %v1744
    %2058 = vmatprep.subr.mxu0 %v1751
    %2059 = vmatpush1.msra.mxu0 %v1750
    %2060 = vmatprep.subr.mxu0 %v1757
    %2061 = vmatpush1.msra.mxu0 %v1756
    %2062 = vmatprep.subr.mxu0 %v1763
    %2063 = vmatpush1.msra.mxu0 %v1762
    %2064 = vmatprep.subr.mxu0 %v1769
    %2065 = vmatpush1.msra.mxu0 %v1768
    %2066 = vmatprep.subr.mxu0 %v1775
    %2067 = vmatpush1.msra.mxu0 %v1774
    %2068 = vmatprep.subr.mxu0 %v1781
    %2069 = vmatpush1.msra.mxu0 %v1780
    %2070 = vmatprep.subr.mxu0 %v1787
    %2071 = vmatpush1.msra.mxu0 %v1786
    %2072 = vmatprep.subr.mxu0 %v1793
    %2073 = vmatpush1.msra.mxu0 %v1792
    %2074 = vmatprep.subr.mxu0 %v1799
    %2075 = vmatpush1.msra.mxu0 %v1798
    %2076 = vmatprep.subr.mxu0 %v1805
    %2077 = vmatpush1.msra.mxu0 %v1804
    %2078 = vmatprep.subr.mxu0 %v1811
    %2079 = vmatpush1.msra.mxu0 %v1810
    %2080 = vmatprep.subr.mxu0 %v1817
    %2081 = vmatpush1.msra.mxu0 %v1816
    %2082 = vmatprep.subr.mxu0 %v1823
    %2083 = vmatpush1.msra.mxu0 %v1822
    %2084 = vmatprep.mubr.f32.mxu0 %v1633
    %2085 = vmatmul.mubr.f32.gmra.mrb[0].mxu0 %v1632
    %v2086 = vpop.f32.mrb[0].mxu0
    %v2087 = vadd.f32 0.0, %v2086
    %v2088 = vpop.f32.mrb[0].mxu0
    %v2089 = vadd.f32 0.0, %v2088
    %2090 = vdwg.mxu0
    %2091 = vmatprep.subr.mxu0 %v1829
    %2092 = vmatpush1.msra.mxu0 %v1828
    %2093 = vmatprep.subr.mxu0 %v1835
    %2094 = vmatpush1.msra.mxu0 %v1834
    %2095 = vmatprep.subr.mxu0 %v1841
    %2096 = vmatpush1.msra.mxu0 %v1840
    %2097 = vmatprep.subr.mxu0 %v1847
    %2098 = vmatpush1.msra.mxu0 %v1846
    %2099 = vmatprep.subr.mxu0 %v1853
    %2100 = vmatpush1.msra.mxu0 %v1852
    %2101 = vmatprep.subr.mxu0 %v1859
    %2102 = vmatpush1.msra.mxu0 %v1858
    %2103 = vmatprep.subr.mxu0 %v1865
    %2104 = vmatpush1.msra.mxu0 %v1864
    %2105 = vmatprep.subr.mxu0 %v1871
    %2106 = vmatpush1.msra.mxu0 %v1870
    %2107 = vmatprep.subr.mxu0 %v1877
    %2108 = vmatpush1.msra.mxu0 %v1876
    %2109 = vmatprep.subr.mxu0 %v1883
    %2110 = vmatpush1.msra.mxu0 %v1882
    %2111 = vmatprep.subr.mxu0 %v1889
    %2112 = vmatpush1.msra.mxu0 %v1888
    %2113 = vmatprep.subr.mxu0 %v1895
    %2114 = vmatpush1.msra.mxu0 %v1894
    %2115 = vmatprep.subr.mxu0 %v1901
    %2116 = vmatpush1.msra.mxu0 %v1900
    %2117 = vmatprep.subr.mxu0 %v1907
    %2118 = vmatpush1.msra.mxu0 %v1906
    %2119 = vmatprep.subr.mxu0 %v1913
    %2120 = vmatpush1.msra.mxu0 %v1912
    %2121 = vmatprep.subr.mxu0 %v1919
    %2122 = vmatpush1.msra.mxu0 %v1918
    %2123 = vmatprep.subr.mxu0 %v1925
    %2124 = vmatpush1.msra.mxu0 %v1924
    %2125 = vmatprep.subr.mxu0 %v1931
    %2126 = vmatpush1.msra.mxu0 %v1930
    %2127 = vmatprep.subr.mxu0 %v1937
    %2128 = vmatpush1.msra.mxu0 %v1936
    %2129 = vmatprep.subr.mxu0 %v1943
    %2130 = vmatpush1.msra.mxu0 %v1942
    %2131 = vmatprep.subr.mxu0 %v1949
    %2132 = vmatpush1.msra.mxu0 %v1948
    %2133 = vmatprep.subr.mxu0 %v1955
    %2134 = vmatpush1.msra.mxu0 %v1954
    %2135 = vmatprep.subr.mxu0 %v1961
    %2136 = vmatpush1.msra.mxu0 %v1960
    %2137 = vmatprep.subr.mxu0 %v1967
    %2138 = vmatpush1.msra.mxu0 %v1966
    %2139 = vmatprep.subr.mxu0 %v1973
    %2140 = vmatpush1.msra.mxu0 %v1972
    %2141 = vmatprep.subr.mxu0 %v1979
    %2142 = vmatpush1.msra.mxu0 %v1978
    %2143 = vmatprep.subr.mxu0 %v1985
    %2144 = vmatpush1.msra.mxu0 %v1984
    %2145 = vmatprep.subr.mxu0 %v1991
    %2146 = vmatpush1.msra.mxu0 %v1990
    %2147 = vmatprep.subr.mxu0 %v1997
    %2148 = vmatpush1.msra.mxu0 %v1996
    %2149 = vmatprep.subr.mxu0 %v2003
    %2150 = vmatpush1.msra.mxu0 %v2002
    %2151 = vmatprep.subr.mxu0 %v2009
    %2152 = vmatpush1.msra.mxu0 %v2008
    %2153 = vmatprep.subr.mxu0 %v2015
    %2154 = vmatpush1.msra.mxu0 %v2014
    %2155 = vmatprep.mubr.f32.mxu0 %v1635
    %2156 = vmatmul.mubr.f32.gmra.mrb[0].mxu0 %v1634
    %v2157 = vpop.f32.mrb[0].mxu0
    %v2158 = vadd.f32 %v2087, %v2157
    %v2159 = vpop.f32.mrb[0].mxu0
    %v2160 = vadd.f32 %v2089, %v2159
    %2161 = vdwg.mxu0
    %2162 = vmatprep.subr.mxu0 %v1639
    %2163 = vmatpush1.msra.mxu0 %v1638
    %2164 = vmatprep.subr.mxu0 %v1645
    %2165 = vmatpush1.msra.mxu0 %v1644
    %2166 = vmatprep.subr.mxu0 %v1651
    %2167 = vmatpush1.msra.mxu0 %v1650
    %2168 = vmatprep.subr.mxu0 %v1657
    %2169 = vmatpush1.msra.mxu0 %v1656
    %2170 = vmatprep.subr.mxu0 %v1663
    %2171 = vmatpush1.msra.mxu0 %v1662
    %2172 = vmatprep.subr.mxu0 %v1669
    %2173 = vmatpush1.msra.mxu0 %v1668
    %2174 = vmatprep.subr.mxu0 %v1675
    %2175 = vmatpush1.msra.mxu0 %v1674
    %2176 = vmatprep.subr.mxu0 %v1681
    %2177 = vmatpush1.msra.mxu0 %v1680
    %2178 = vmatprep.subr.mxu0 %v1687
    %2179 = vmatpush1.msra.mxu0 %v1686
    %2180 = vmatprep.subr.mxu0 %v1693
    %2181 = vmatpush1.msra.mxu0 %v1692
    %2182 = vmatprep.subr.mxu0 %v1699
    %2183 = vmatpush1.msra.mxu0 %v1698
    %2184 = vmatprep.subr.mxu0 %v1705
    %2185 = vmatpush1.msra.mxu0 %v1704
    %2186 = vmatprep.subr.mxu0 %v1711
    %2187 = vmatpush1.msra.mxu0 %v1710
    %2188 = vmatprep.subr.mxu0 %v1717
    %2189 = vmatpush1.msra.mxu0 %v1716
    %2190 = vmatprep.subr.mxu0 %v1723
    %2191 = vmatpush1.msra.mxu0 %v1722
    %2192 = vmatprep.subr.mxu0 %v1729
    %2193 = vmatpush1.msra.mxu0 %v1728
    %2194 = vmatprep.subr.mxu0 %v1735
    %2195 = vmatpush1.msra.mxu0 %v1734
    %2196 = vmatprep.subr.mxu0 %v1741
    %2197 = vmatpush1.msra.mxu0 %v1740
    %2198 = vmatprep.subr.mxu0 %v1747
    %2199 = vmatpush1.msra.mxu0 %v1746
    %2200 = vmatprep.subr.mxu0 %v1753
    %2201 = vmatpush1.msra.mxu0 %v1752
    %2202 = vmatprep.subr.mxu0 %v1759
    %2203 = vmatpush1.msra.mxu0 %v1758
    %2204 = vmatprep.subr.mxu0 %v1765
    %2205 = vmatpush1.msra.mxu0 %v1764
    %2206 = vmatprep.subr.mxu0 %v1771
    %2207 = vmatpush1.msra.mxu0 %v1770
    %2208 = vmatprep.subr.mxu0 %v1777
    %2209 = vmatpush1.msra.mxu0 %v1776
    %2210 = vmatprep.subr.mxu0 %v1783
    %2211 = vmatpush1.msra.mxu0 %v1782
    %2212 = vmatprep.subr.mxu0 %v1789
    %2213 = vmatpush1.msra.mxu0 %v1788
    %2214 = vmatprep.subr.mxu0 %v1795
    %2215 = vmatpush1.msra.mxu0 %v1794
    %2216 = vmatprep.subr.mxu0 %v1801
    %2217 = vmatpush1.msra.mxu0 %v1800
    %2218 = vmatprep.subr.mxu0 %v1807
    %2219 = vmatpush1.msra.mxu0 %v1806
    %2220 = vmatprep.subr.mxu0 %v1813
    %2221 = vmatpush1.msra.mxu0 %v1812
    %2222 = vmatprep.subr.mxu0 %v1819
    %2223 = vmatpush1.msra.mxu0 %v1818
    %2224 = vmatprep.subr.mxu0 %v1825
    %2225 = vmatpush1.msra.mxu0 %v1824
    %2226 = vmatprep.mubr.f32.mxu0 %v1633
    %2227 = vmatmul.mubr.f32.gmra.mrb[0].mxu0 %v1632
    %v2228 = vpop.f32.mrb[0].mxu0
    %v2229 = vadd.f32 0.0, %v2228
    %v2230 = vpop.f32.mrb[0].mxu0
    %v2231 = vadd.f32 0.0, %v2230
    %2232 = vdwg.mxu0
    %2233 = vmatprep.subr.mxu0 %v1831
    %2234 = vmatpush1.msra.mxu0 %v1830
    %2235 = vmatprep.subr.mxu0 %v1837
    %2236 = vmatpush1.msra.mxu0 %v1836
    %2237 = vmatprep.subr.mxu0 %v1843
    %2238 = vmatpush1.msra.mxu0 %v1842
    %2239 = vmatprep.subr.mxu0 %v1849
    %2240 = vmatpush1.msra.mxu0 %v1848
    %2241 = vmatprep.subr.mxu0 %v1855
    %2242 = vmatpush1.msra.mxu0 %v1854
    %2243 = vmatprep.subr.mxu0 %v1861
    %2244 = vmatpush1.msra.mxu0 %v1860
    %2245 = vmatprep.subr.mxu0 %v1867
    %2246 = vmatpush1.msra.mxu0 %v1866
    %2247 = vmatprep.subr.mxu0 %v1873
    %2248 = vmatpush1.msra.mxu0 %v1872
    %2249 = vmatprep.subr.mxu0 %v1879
    %2250 = vmatpush1.msra.mxu0 %v1878
    %2251 = vmatprep.subr.mxu0 %v1885
    %2252 = vmatpush1.msra.mxu0 %v1884
    %2253 = vmatprep.subr.mxu0 %v1891
    %2254 = vmatpush1.msra.mxu0 %v1890
    %2255 = vmatprep.subr.mxu0 %v1897
    %2256 = vmatpush1.msra.mxu0 %v1896
    %2257 = vmatprep.subr.mxu0 %v1903
    %2258 = vmatpush1.msra.mxu0 %v1902
    %2259 = vmatprep.subr.mxu0 %v1909
    %2260 = vmatpush1.msra.mxu0 %v1908
    %2261 = vmatprep.subr.mxu0 %v1915
    %2262 = vmatpush1.msra.mxu0 %v1914
    %2263 = vmatprep.subr.mxu0 %v1921
    %2264 = vmatpush1.msra.mxu0 %v1920
    %2265 = vmatprep.subr.mxu0 %v1927
    %2266 = vmatpush1.msra.mxu0 %v1926
    %2267 = vmatprep.subr.mxu0 %v1933
    %2268 = vmatpush1.msra.mxu0 %v1932
    %2269 = vmatprep.subr.mxu0 %v1939
    %2270 = vmatpush1.msra.mxu0 %v1938
    %2271 = vmatprep.subr.mxu0 %v1945
    %2272 = vmatpush1.msra.mxu0 %v1944
    %2273 = vmatprep.subr.mxu0 %v1951
    %2274 = vmatpush1.msra.mxu0 %v1950
    %2275 = vmatprep.subr.mxu0 %v1957
    %2276 = vmatpush1.msra.mxu0 %v1956
    %2277 = vmatprep.subr.mxu0 %v1963
    %2278 = vmatpush1.msra.mxu0 %v1962
    %2279 = vmatprep.subr.mxu0 %v1969
    %2280 = vmatpush1.msra.mxu0 %v1968
    %2281 = vmatprep.subr.mxu0 %v1975
    %2282 = vmatpush1.msra.mxu0 %v1974
    %2283 = vmatprep.subr.mxu0 %v1981
    %2284 = vmatpush1.msra.mxu0 %v1980
    %2285 = vmatprep.subr.mxu0 %v1987
    %2286 = vmatpush1.msra.mxu0 %v1986
    %2287 = vmatprep.subr.mxu0 %v1993
    %2288 = vmatpush1.msra.mxu0 %v1992
    %2289 = vmatprep.subr.mxu0 %v1999
    %2290 = vmatpush1.msra.mxu0 %v1998
    %2291 = vmatprep.subr.mxu0 %v2005
    %2292 = vmatpush1.msra.mxu0 %v2004
    %2293 = vmatprep.subr.mxu0 %v2011
    %2294 = vmatpush1.msra.mxu0 %v2010
    %2295 = vmatprep.subr.mxu0 %v2017
    %2296 = vmatpush1.msra.mxu0 %v2016
    %2297 = vmatprep.mubr.f32.mxu0 %v1635
    %2298 = vmatmul.mubr.f32.gmra.mrb[0].mxu0 %v1634
    %v2299 = vpop.f32.mrb[0].mxu0
    %v2300 = vadd.f32 %v2229, %v2299
    %v2301 = vpop.f32.mrb[0].mxu0
    %v2302 = vadd.f32 %v2231, %v2301
    %2303 = vdwg.mxu0
    %2304 = vmatprep.subr.mxu0 %v1641
    %2305 = vmatpush1.msra.mxu0 %v1640
    %2306 = vmatprep.subr.mxu0 %v1647
    %2307 = vmatpush1.msra.mxu0 %v1646
    %2308 = vmatprep.subr.mxu0 %v1653
    %2309 = vmatpush1.msra.mxu0 %v1652
    %2310 = vmatprep.subr.mxu0 %v1659
    %2311 = vmatpush1.msra.mxu0 %v1658
    %2312 = vmatprep.subr.mxu0 %v1665
    %2313 = vmatpush1.msra.mxu0 %v1664
    %2314 = vmatprep.subr.mxu0 %v1671
    %2315 = vmatpush1.msra.mxu0 %v1670
    %2316 = vmatprep.subr.mxu0 %v1677
    %2317 = vmatpush1.msra.mxu0 %v1676
    %2318 = vmatprep.subr.mxu0 %v1683
    %2319 = vmatpush1.msra.mxu0 %v1682
    %2320 = vmatprep.subr.mxu0 %v1689
    %2321 = vmatpush1.msra.mxu0 %v1688
    %2322 = vmatprep.subr.mxu0 %v1695
    %2323 = vmatpush1.msra.mxu0 %v1694
    %2324 = vmatprep.subr.mxu0 %v1701
    %2325 = vmatpush1.msra.mxu0 %v1700
    %2326 = vmatprep.subr.mxu0 %v1707
    %2327 = vmatpush1.msra.mxu0 %v1706
    %2328 = vmatprep.subr.mxu0 %v1713
    %2329 = vmatpush1.msra.mxu0 %v1712
    %2330 = vmatprep.subr.mxu0 %v1719
    %2331 = vmatpush1.msra.mxu0 %v1718
    %2332 = vmatprep.subr.mxu0 %v1725
    %2333 = vmatpush1.msra.mxu0 %v1724
    %2334 = vmatprep.subr.mxu0 %v1731
    %2335 = vmatpush1.msra.mxu0 %v1730
    %2336 = vmatprep.subr.mxu0 %v1737
    %2337 = vmatpush1.msra.mxu0 %v1736
    %2338 = vmatprep.subr.mxu0 %v1743
    %2339 = vmatpush1.msra.mxu0 %v1742
    %2340 = vmatprep.subr.mxu0 %v1749
    %2341 = vmatpush1.msra.mxu0 %v1748
    %2342 = vmatprep.subr.mxu0 %v1755
    %2343 = vmatpush1.msra.mxu0 %v1754
    %2344 = vmatprep.subr.mxu0 %v1761
    %2345 = vmatpush1.msra.mxu0 %v1760
    %2346 = vmatprep.subr.mxu0 %v1767
    %2347 = vmatpush1.msra.mxu0 %v1766
    %2348 = vmatprep.subr.mxu0 %v1773
    %2349 = vmatpush1.msra.mxu0 %v1772
    %2350 = vmatprep.subr.mxu0 %v1779
    %2351 = vmatpush1.msra.mxu0 %v1778
    %2352 = vmatprep.subr.mxu0 %v1785
    %2353 = vmatpush1.msra.mxu0 %v1784
    %2354 = vmatprep.subr.mxu0 %v1791
    %2355 = vmatpush1.msra.mxu0 %v1790
    %2356 = vmatprep.subr.mxu0 %v1797
    %2357 = vmatpush1.msra.mxu0 %v1796
    %2358 = vmatprep.subr.mxu0 %v1803
    %2359 = vmatpush1.msra.mxu0 %v1802
    %2360 = vmatprep.subr.mxu0 %v1809
    %2361 = vmatpush1.msra.mxu0 %v1808
    %2362 = vmatprep.subr.mxu0 %v1815
    %2363 = vmatpush1.msra.mxu0 %v1814
    %2364 = vmatprep.subr.mxu0 %v1821
    %2365 = vmatpush1.msra.mxu0 %v1820
    %2366 = vmatprep.subr.mxu0 %v1827
    %2367 = vmatpush1.msra.mxu0 %v1826
    %2368 = vmatprep.mubr.f32.mxu0 %v1633
    %2369 = vmatmul.mubr.f32.gmra.mrb[0].mxu0 %v1632
    %v2370 = vpop.f32.mrb[0].mxu0
    %v2371 = vadd.f32 0.0, %v2370
    %v2372 = vpop.f32.mrb[0].mxu0
    %v2373 = vadd.f32 0.0, %v2372
    %2374 = vdwg.mxu0
    %2375 = vmatprep.subr.mxu0 %v1833
    %2376 = vmatpush1.msra.mxu0 %v1832
    %2377 = vmatprep.subr.mxu0 %v1839
    %2378 = vmatpush1.msra.mxu0 %v1838
    %2379 = vmatprep.subr.mxu0 %v1845
    %2380 = vmatpush1.msra.mxu0 %v1844
    %2381 = vmatprep.subr.mxu0 %v1851
    %2382 = vmatpush1.msra.mxu0 %v1850
    %2383 = vmatprep.subr.mxu0 %v1857
    %2384 = vmatpush1.msra.mxu0 %v1856
    %2385 = vmatprep.subr.mxu0 %v1863
    %2386 = vmatpush1.msra.mxu0 %v1862
    %2387 = vmatprep.subr.mxu0 %v1869
    %2388 = vmatpush1.msra.mxu0 %v1868
    %2389 = vmatprep.subr.mxu0 %v1875
    %2390 = vmatpush1.msra.mxu0 %v1874
    %2391 = vmatprep.subr.mxu0 %v1881
    %2392 = vmatpush1.msra.mxu0 %v1880
    %2393 = vmatprep.subr.mxu0 %v1887
    %2394 = vmatpush1.msra.mxu0 %v1886
    %2395 = vmatprep.subr.mxu0 %v1893
    %2396 = vmatpush1.msra.mxu0 %v1892
    %2397 = vmatprep.subr.mxu0 %v1899
    %2398 = vmatpush1.msra.mxu0 %v1898
    %2399 = vmatprep.subr.mxu0 %v1905
    %2400 = vmatpush1.msra.mxu0 %v1904
    %2401 = vmatprep.subr.mxu0 %v1911
    %2402 = vmatpush1.msra.mxu0 %v1910
    %2403 = vmatprep.subr.mxu0 %v1917
    %2404 = vmatpush1.msra.mxu0 %v1916
    %2405 = vmatprep.subr.mxu0 %v1923
    %2406 = vmatpush1.msra.mxu0 %v1922
    %2407 = vmatprep.subr.mxu0 %v1929
    %2408 = vmatpush1.msra.mxu0 %v1928
    %2409 = vmatprep.subr.mxu0 %v1935
    %2410 = vmatpush1.msra.mxu0 %v1934
    %2411 = vmatprep.subr.mxu0 %v1941
    %2412 = vmatpush1.msra.mxu0 %v1940
    %2413 = vmatprep.subr.mxu0 %v1947
    %2414 = vmatpush1.msra.mxu0 %v1946
    %2415 = vmatprep.subr.mxu0 %v1953
    %2416 = vmatpush1.msra.mxu0 %v1952
    %2417 = vmatprep.subr.mxu0 %v1959
    %2418 = vmatpush1.msra.mxu0 %v1958
    %2419 = vmatprep.subr.mxu0 %v1965
    %2420 = vmatpush1.msra.mxu0 %v1964
    %2421 = vmatprep.subr.mxu0 %v1971
    %2422 = vmatpush1.msra.mxu0 %v1970
    %2423 = vmatprep.subr.mxu0 %v1977
    %2424 = vmatpush1.msra.mxu0 %v1976
    %2425 = vmatprep.subr.mxu0 %v1983
    %2426 = vmatpush1.msra.mxu0 %v1982
    %2427 = vmatprep.subr.mxu0 %v1989
    %2428 = vmatpush1.msra.mxu0 %v1988
    %2429 = vmatprep.subr.mxu0 %v1995
    %2430 = vmatpush1.msra.mxu0 %v1994
    %2431 = vmatprep.subr.mxu0 %v2001
    %2432 = vmatpush1.msra.mxu0 %v2000
    %2433 = vmatprep.subr.mxu0 %v2007
    %2434 = vmatpush1.msra.mxu0 %v2006
    %2435 = vmatprep.subr.mxu0 %v2013
    %2436 = vmatpush1.msra.mxu0 %v2012
    %2437 = vmatprep.subr.mxu0 %v2019
    %2438 = vmatpush1.msra.mxu0 %v2018
    %2439 = vmatprep.mubr.f32.mxu0 %v1635
    %2440 = vmatmul.mubr.f32.gmra.mrb[0].mxu0 %v1634
    %v2441 = vpop.f32.mrb[0].mxu0
    %v2442 = vadd.f32 %v2371, %v2441
    %v2443 = vpop.f32.mrb[0].mxu0
    %v2444 = vadd.f32 %v2373, %v2443
    %2445 = vdwg.mxu0
    %v2446 = vtanh.pop %v2158
    %v2447 = vtanh.pop %v2160
    %v2448 = vtanh.pop %v2300
    %v2449 = vtanh.pop %v2302
    %v2450 = vtanh.pop %v2442
    %v2451 = vtanh.pop %v2444
    %v2458 = vcombine.low %v2446, %v2447
    %v2459 = vcombine.low %v2448, %v2449
    %v2461 = vunpack.c.l.s4 1983009808
    %v2462 = vunpack.c.0.s8 %v2461
    %v2463 = vlaneseq
    %v2464 = vshrl.u32 %v2463, 7
    %v2465 = vsub.s32 %v2462, %v2464
    %v2466 = vrot.slane %v2458, %v2465
    %v2468 = vunpack.c.l.s4 1983009808
    %v2469 = vunpack.c.0.s8 %v2468
    %v2470 = vlaneseq
    %v2471 = vshrl.u32 %v2470, 7
    %v2472 = vsub.s32 %v2469, %v2471
    %v2473 = vrot.slane %v2459, %v2472
    %v2474 = vcombine.low %v2466, %v2473
    %v2475 = vcombine.low %v2450, %v2451
    %v2477 = vunpack.c.l.s4 1983009808
    %v2478 = vunpack.c.0.s8 %v2477
    %v2479 = vlaneseq
    %v2480 = vshrl.u32 %v2479, 7
    %v2481 = vsub.s32 %v2478, %v2480
    %v2482 = vrot.slane %v2475, %v2481
    %2485 = vst [vmem:[#allocation17] sm:$0xff] %v2474
    %2486 = vst [vmem:[#allocation17 + $0x8] sm:$0xf] %v2482
    // Predicated region
    $region82: #{tpu_custom_call.1} parent=1 // pred_check
      _
    $region83: #{tpu_custom_call.1} parent=1 // pred_check_branch
      %2488 = sbr.rel (0) target = $region85
    $region84: #{tpu_custom_call.1} parent=1 // pred_region
      %s2490 = ssub.s32 192, 192
      %2491 = vsyncadd [#allocation4], %s2490
      %s2493 = sshll.u32 [#allocation17], 4
      %s2494 = int_to_ptr.vmem [resolvable:$true] %s2493
      %2496 = dma.vmem_to_hbm [thread:$0]  %s2494, 192, %s11, [#allocation4]
    $region85: #{tpu_custom_call.1} parent=1 // pred_fallthru
      _
    // Predicated region
    $region86: #{tpu_custom_call.1} parent=1 // pred_check
      _
    $region87: #{tpu_custom_call.1} parent=1 // pred_check_branch
      %2498 = sbr.rel (0) target = $region89
    $region88: #{tpu_custom_call.1} parent=1 // pred_region
      %2499 = dma.done [#allocation4], 192
    $region89: #{tpu_custom_call.1} parent=1 // pred_fallthru
      _
    %2500 = vsyncpa [#allocation3], 1
    %2501 = vsyncpa [#allocation6], 1
    %2502 = vsyncpa [#allocation9], 1
    %2503 = vsyncpa [#allocation12], 1
    %2504 = vsyncpa [#allocation15], 1
    %2505 = vsyncpa [#allocation4], 1

</llo_original>
